<compile_context>
chip_gen: v7x
topology: tpu7x:2x2x1
jax: 0.10.0
libtpu: 0.0.40
codegen_flags: <defaults>
</compile_context>

<pallas_src>
import math

import jax
import jax.numpy as jnp
from jax.experimental import pallas as pl
from jax.experimental.pallas import tpu as pltpu


PAD = 128          # lane-dense feature width for every kernel-visible matrix
_BN_EPS = 1e-5


# ----------------------------------------------------------------------------
# Pallas kernels (all weights already BN/bias-folded and zero-padded to 128)
# ----------------------------------------------------------------------------
def _node_side_kernel(xin_ref, wenc_ref, benc_ref, wrow_ref, wcol_ref,
                      a_ref, b_ref):
    # node_emb = relu([sin(x), cos(x), node_attr] @ W_enc + b_enc)
    ne = jnp.dot(xin_ref[...], wenc_ref[...], preferred_element_type=jnp.float32)
    ne = jnp.maximum(ne + benc_ref[...], 0.0)
    # message partials for the factored edge-MLP first layer
    a_ref[...] = jnp.dot(ne, wrow_ref[...],
                         preferred_element_type=jnp.float32).astype(a_ref.dtype)
    b_ref[...] = jnp.dot(ne, wcol_ref[...],
                         preferred_element_type=jnp.float32).astype(b_ref.dtype)


def _edge_side_kernel(ein_ref, arow_ref, bcol_ref, wee_ref, bee_ref,
                      wme_ref, bec1_ref, wec2_ref, bec2_ref, o_ref):
    # edge encoder
    ee = jnp.dot(ein_ref[...], wee_ref[...], preferred_element_type=jnp.float32)
    ee = jnp.maximum(ee + bee_ref[...], 0.0)
    # factored edge-MLP layer 1: A[row] + B[col] + edge_emb @ W1_edge + b1
    h = arow_ref[...] + bcol_ref[...] + bec1_ref[...]
    h = h + jnp.dot(ee, wme_ref[...], preferred_element_type=jnp.float32)
    h = jnp.maximum(h, 0.0)
    # edge-MLP output layer (no activation)
    out = jnp.dot(h, wec2_ref[...], preferred_element_type=jnp.float32)
    o_ref[...] = (out + bec2_ref[...]).astype(o_ref.dtype)


def _node_update_kernel(agg_ref, w1_ref, b1_ref, w2_ref, b2_ref,
                        wd_ref, bd_ref, o_ref):
    # node_calculator MLP
    h = jnp.dot(agg_ref[...], w1_ref[...], preferred_element_type=jnp.float32)
    h = jnp.maximum(h + b1_ref[...], 0.0)
    g = jnp.dot(h, w2_ref[...], preferred_element_type=jnp.float32) + b2_ref[...]
    # state_decoder (identity inverse output scaler)
    out = jnp.dot(g, wd_ref[...], preferred_element_type=jnp.float32)
    o_ref[...] = (out + bd_ref[...]).astype(o_ref.dtype)


# ----------------------------------------------------------------------------
# pallas_call wrapper: row axis tiled with a parallel grid, params resident
# ----------------------------------------------------------------------------
def _row_call(kernel, row_inputs, param_inputs, num_outputs, tile):
    n_rows = row_inputs[0].shape[0]
    grid = (n_rows // tile,)
    row_spec = pl.BlockSpec((tile, PAD), lambda i: (i, 0))
    param_spec = pl.BlockSpec((PAD, PAD), lambda i: (0, 0))
    bias_spec = pl.BlockSpec((1, PAD), lambda i: (0, 0))
    param_specs = [param_spec if p.shape[0] == PAD else bias_spec
                   for p in param_inputs]
    out_shape = tuple(jax.ShapeDtypeStruct((n_rows, PAD), jnp.float32)
                      for _ in range(num_outputs))
    return pl.pallas_call(
        kernel,
        out_shape=out_shape,
        grid=grid,
        in_specs=[row_spec] * len(row_inputs) + param_specs,
        out_specs=tuple(row_spec for _ in range(num_outputs)),
        compiler_params=pltpu.CompilerParams(
            dimension_semantics=("parallel",)),
    )(*row_inputs, *param_inputs)


# ----------------------------------------------------------------------------
# Parameter construction (deterministic, PyTorch-style uniform init)
# ----------------------------------------------------------------------------
def _linear_init(key, fan_in, fan_out):
    kw, kb = jax.random.split(key)
    bound = 1.0 / math.sqrt(fan_in)
    w = jax.random.uniform(kw, (fan_in, fan_out), jnp.float32, -bound, bound)
    b = jax.random.uniform(kb, (fan_out,), jnp.float32, -bound, bound)
    return w, b


def _bn_fold(dim):
    # Eval-mode BatchNorm1d with default stats: gamma=1, beta=0, mean=0, var=1.
    scale = jnp.full((dim,), 1.0 / math.sqrt(1.0 + _BN_EPS), jnp.float32)
    shift = jnp.zeros((dim,), jnp.float32)
    return scale, shift


def init_params(key, state_embedding_dims, node_embedding_dims,
                edge_embedding_dims, glob_embedding_dims,
                node_hidden_dim, edge_hidden_dim):
    del glob_embedding_dims  # glob branch unused (zero features)
    state_dim = len(state_embedding_dims)
    state_emb_dim = 2 * sum(state_embedding_dims)
    node_emb_dim = state_emb_dim + sum(node_embedding_dims)
    edge_emb_dim = sum(edge_embedding_dims)

    keys = jax.random.split(key, 8)
    p = {}
    p["se_w"], p["se_b"] = _linear_init(keys[0], 2 * state_dim, state_emb_dim)
    p["se_scale"], p["se_shift"] = _bn_fold(state_emb_dim)
    p["ne_w"], p["ne_b"] = _linear_init(keys[1], len(node_embedding_dims),
                                        sum(node_embedding_dims))
    p["ne_scale"], p["ne_shift"] = _bn_fold(sum(node_embedding_dims))
    p["ee_w"], p["ee_b"] = _linear_init(keys[2], len(edge_embedding_dims),
                                        edge_emb_dim)
    p["ee_scale"], p["ee_shift"] = _bn_fold(edge_emb_dim)

    ec_in = 2 * node_emb_dim + edge_emb_dim
    p["ec_w1"], p["ec_b1"] = _linear_init(keys[3], ec_in, edge_hidden_dim)
    p["ec_scale"], p["ec_shift"] = _bn_fold(edge_hidden_dim)
    p["ec_w2"], p["ec_b2"] = _linear_init(keys[4], edge_hidden_dim, edge_emb_dim)

    p["nc_w1"], p["nc_b1"] = _linear_init(keys[5], edge_emb_dim, node_hidden_dim)
    p["nc_scale"], p["nc_shift"] = _bn_fold(node_hidden_dim)
    p["nc_w2"], p["nc_b2"] = _linear_init(keys[6], node_hidden_dim, node_emb_dim)

    p["sd_w"], p["sd_b"] = _linear_init(keys[7], node_emb_dim, state_dim)
    return p


# ----------------------------------------------------------------------------
# Host-side fold (BN into W/b) + zero-pad to 128 lanes + block splits
# ----------------------------------------------------------------------------
def _pad2(w):
    assert w.shape[0] <= PAD and w.shape[1] <= PAD
    out = jnp.zeros((PAD, PAD), jnp.float32)
    return out.at[:w.shape[0], :w.shape[1]].set(w.astype(jnp.float32))


def _pad_row(b):
    assert b.shape[0] <= PAD
    out = jnp.zeros((1, PAD), jnp.float32)
    return out.at[0, :b.shape[0]].set(b.astype(jnp.float32))


def prepare_params(p, state_embedding_dims, node_embedding_dims,
                   edge_embedding_dims):
    state_dim = len(state_embedding_dims)
    state_emb_dim = 2 * sum(state_embedding_dims)
    node_attr_dim = len(node_embedding_dims)
    node_emb_dim = state_emb_dim + sum(node_embedding_dims)

    f = {}
    # --- encoder: state + node branches as one block-diagonal folded weight ---
    w_enc = jnp.zeros((PAD, PAD), jnp.float32)
    w_enc = w_enc.at[:2 * state_dim, :state_emb_dim].set(
        p["se_w"] * p["se_scale"][None, :])
    w_enc = w_enc.at[2 * state_dim:2 * state_dim + node_attr_dim,
                     state_emb_dim:node_emb_dim].set(
        p["ne_w"] * p["ne_scale"][None, :])
    b_enc = jnp.zeros((1, PAD), jnp.float32)
    b_enc = b_enc.at[0, :state_emb_dim].set(
        p["se_b"] * p["se_scale"] + p["se_shift"])
    b_enc = b_enc.at[0, state_emb_dim:node_emb_dim].set(
        p["ne_b"] * p["ne_scale"] + p["ne_shift"])
    f["w_enc"], f["b_enc"] = w_enc, b_enc

    # --- edge encoder (BN folded) ---
    f["w_ee"] = _pad2(p["ee_w"] * p["ee_scale"][None, :])
    f["b_ee"] = _pad_row(p["ee_b"] * p["ee_scale"] + p["ee_shift"])

    # --- edge_calculator layer 1 split into row / col / edge blocks ---
    s = p["ec_scale"][None, :]
    f["w_msg_row"] = _pad2(p["ec_w1"][:node_emb_dim] * s)
    f["w_msg_col"] = _pad2(p["ec_w1"][node_emb_dim:2 * node_emb_dim] * s)
    f["w_msg_edge"] = _pad2(p["ec_w1"][2 * node_emb_dim:] * s)
    f["b_ec1"] = _pad_row(p["ec_b1"] * p["ec_scale"] + p["ec_shift"])
    f["w_ec2"] = _pad2(p["ec_w2"])
    f["b_ec2"] = _pad_row(p["ec_b2"])

    # --- node_calculator (BN folded) ---
    f["w_nc1"] = _pad2(p["nc_w1"] * p["nc_scale"][None, :])
    f["b_nc1"] = _pad_row(p["nc_b1"] * p["nc_scale"] + p["nc_shift"])
    f["w_nc2"] = _pad2(p["nc_w2"])
    f["b_nc2"] = _pad_row(p["nc_b2"])

    # --- state decoder ---
    f["w_sd"] = _pad2(p["sd_w"])
    f["b_sd"] = _pad_row(p["sd_b"])
    return f


# ----------------------------------------------------------------------------
# Forward pass (inference: dropout = identity, BN uses running stats)
# ----------------------------------------------------------------------------
def _round_up(n, m):
    return ((n + m - 1) // m) * m


def _pad_to(a, rows, cols):
    return jnp.pad(a, ((0, rows - a.shape[0]), (0, cols - a.shape[1])))


@jax.jit
def kuramoto_forward(fp, x, edge_index, batch, node_attr, edge_attr, glob_attr):
    del glob_attr  # glob_embedding_dims = [] -> glob branch unused in forward
    row, col = edge_index[0], edge_index[1]
    num_nodes = batch.shape[0]
    num_edges = edge_attr.shape[0]
    state_dim = x.shape[-1]

    # Row-tile sizes (multiples of 8 sublanes, capped for VMEM headroom).
    node_tile = min(_round_up(num_nodes, 8), 256)
    edge_tile = min(_round_up(num_edges, 8), 256)
    n_nodes_pad = _round_up(num_nodes, node_tile)
    n_edges_pad = _round_up(num_edges, edge_tile)

    # SinCosScaler (elementwise glue) + combined node-side input, 128-lane pad.
    feats = jnp.concatenate([jnp.sin(x), jnp.cos(x), node_attr], axis=-1)
    xin = _pad_to(feats, n_nodes_pad, PAD)
    ein = _pad_to(edge_attr, n_edges_pad, PAD)

    # Kernel 1: node encoder + row/col message partials (node-row matmuls).
    a_nodes, b_nodes = _row_call(
        _node_side_kernel,
        [xin],
        [fp["w_enc"], fp["b_enc"], fp["w_msg_row"], fp["w_msg_col"]],
        num_outputs=2, tile=node_tile)

    # Gather precomputed partials per edge (indexing glue, narrow per-edge rows).
    a_row = _pad_to(jnp.take(a_nodes, row, axis=0), n_edges_pad, PAD)
    b_col = _pad_to(jnp.take(b_nodes, col, axis=0), n_edges_pad, PAD)

    # Kernel 2: edge encoder + edge_calculator MLP (edge-row matmuls).
    (interaction,) = _row_call(
        _edge_side_kernel,
        [ein, a_row, b_col],
        [fp["w_ee"], fp["b_ee"], fp["w_msg_edge"],
         fp["b_ec1"], fp["w_ec2"], fp["b_ec2"]],
        num_outputs=1, tile=edge_tile)

    # scatter_sum(interaction, col, dim_size=num_nodes) as a real segment-sum.
    aggregated = jax.ops.segment_sum(interaction[:num_edges], col,
                                     num_segments=num_nodes)
    agg_pad = _pad_to(aggregated, n_nodes_pad, PAD)

    # Kernel 3: node_calculator MLP + state_decoder.
    (out_pad,) = _row_call(
        _node_update_kernel,
        [agg_pad],
        [fp["w_nc1"], fp["b_nc1"], fp["w_nc2"], fp["b_nc2"],
         fp["w_sd"], fp["b_sd"]],
        num_outputs=1, tile=node_tile)
    return out_pad[:num_nodes, :state_dim]


# ----------------------------------------------------------------------------
# Pure-JAX reference (unfused, unfolded) for correctness checking
# ----------------------------------------------------------------------------
def reference_forward(p, x, edge_index, batch, node_attr, edge_attr, glob_attr):
    del glob_attr
    row, col = edge_index[0], edge_index[1]
    n = batch.shape[0]

    def lin(v, w, b, scale=None, shift=None, relu=False):
        h = v @ w + b
        if scale is not None:
            h = h * scale + shift
        if relu:
            h = jnp.maximum(h, 0.0)
        return h

    feats = jnp.concatenate([jnp.sin(x), jnp.cos(x)], axis=-1)
    state_emb = lin(feats, p["se_w"], p["se_b"], p["se_scale"], p["se_shift"], True)
    node_emb0 = lin(node_attr, p["ne_w"], p["ne_b"], p["ne_scale"], p["ne_shift"], True)
    edge_emb = lin(edge_attr, p["ee_w"], p["ee_b"], p["ee_scale"], p["ee_shift"], True)
    node_emb = jnp.concatenate([state_emb, node_emb0], axis=-1)
    inter = jnp.concatenate([node_emb[row], node_emb[col], edge_emb], axis=-1)
    h = lin(inter, p["ec_w1"], p["ec_b1"], p["ec_scale"], p["ec_shift"], True)
    inter = h @ p["ec_w2"] + p["ec_b2"]
    agg = jax.ops.segment_sum(inter, col, num_segments=n)
    h = lin(agg, p["nc_w1"], p["nc_b1"], p["nc_scale"], p["nc_shift"], True)
    agg = h @ p["nc_w2"] + p["nc_b2"]
    return agg @ p["sd_w"] + p["sd_b"]


# ----------------------------------------------------------------------------
if __name__ == "__main__":
    key = jax.random.PRNGKey(0)
    k_param, k_x, k_na, k_ea, k_ei = jax.random.split(key, 5)

    # Hyper-parameters (small, consistent with the module's dimensionality math)
    state_embedding_dims = [8]   # state_dim = 1
    node_embedding_dims = [8]
    edge_embedding_dims = [8]
    glob_embedding_dims = []     # glob_attr has zero features
    node_hidden_dim = 32
    edge_hidden_dim = 32

    B = 2                      # graphs in the batch
    nodes_per_graph = 8
    BN = B * nodes_per_graph   # 16 nodes total
    BE = 32                    # edges total

    x = jax.random.uniform(k_x, (BN, 1), jnp.float32, -math.pi, math.pi)
    node_attr = jax.random.normal(k_na, (BN, 1), jnp.float32)
    edge_attr = jax.random.normal(k_ea, (BE, 1), jnp.float32)
    glob_attr = jnp.zeros((B, 0), jnp.float32)
    edge_index = jax.random.randint(k_ei, (2, BE), 0, BN, jnp.int32)
    batch = jnp.repeat(jnp.arange(B, dtype=jnp.int32), nodes_per_graph)

    params = init_params(k_param,
                         state_embedding_dims, node_embedding_dims,
                         edge_embedding_dims, glob_embedding_dims,
                         node_hidden_dim, edge_hidden_dim)
    folded = prepare_params(params, state_embedding_dims, node_embedding_dims,
                            edge_embedding_dims)

    out = kuramoto_forward(folded, x, edge_index, batch,
                           node_attr, edge_attr, glob_attr)
    out = jax.block_until_ready(out)

    assert out.shape == (BN, len(state_embedding_dims)), out.shape
    assert out.dtype == jnp.float32
    assert bool(jnp.all(jnp.isfinite(out)))

    ref = reference_forward(params, x, edge_index, batch,
                            node_attr, edge_attr, glob_attr)
    assert bool(jnp.allclose(out, ref, atol=1e-4, rtol=1e-4)), (
        float(jnp.max(jnp.abs(out - ref))))

    print("KERNEL_OK")
</pallas_src>

<mosaic_0001>
module attributes {stable_mosaic.version = 11 : i64} {
  func.func @_node_side_kernel(%arg0: i32, %arg1: memref<16x128xf32, #tpu.memory_space<vmem>>, %arg2: memref<128x128xf32, #tpu.memory_space<vmem>>, %arg3: memref<1x128xf32, #tpu.memory_space<vmem>>, %arg4: memref<128x128xf32, #tpu.memory_space<vmem>>, %arg5: memref<128x128xf32, #tpu.memory_space<vmem>>, %arg6: memref<16x128xf32, #tpu.memory_space<vmem>>, %arg7: memref<16x128xf32, #tpu.memory_space<vmem>>) attributes {dimension_semantics = [#tpu.dimension_semantics<parallel>], iteration_bounds = array<i64: 1>, scalar_prefetch = 0 : i64, scratch_operands = 0 : i64, tpu.core_type = #tpu.core_type<tc>, window_params = [{transform_indices = @transform_0, window_bounds = array<i64: 16, 128>}, {pipeline_mode = #tpu.pipeline_mode<synchronous>, transform_indices = @transform_1, window_bounds = array<i64: 128, 128>}, {pipeline_mode = #tpu.pipeline_mode<synchronous>, transform_indices = @transform_2, window_bounds = array<i64: 1, 128>}, {pipeline_mode = #tpu.pipeline_mode<synchronous>, transform_indices = @transform_3, window_bounds = array<i64: 128, 128>}, {pipeline_mode = #tpu.pipeline_mode<synchronous>, transform_indices = @transform_4, window_bounds = array<i64: 128, 128>}, {transform_indices = @transform_5, window_bounds = array<i64: 16, 128>}, {transform_indices = @transform_6, window_bounds = array<i64: 16, 128>}]} {
    %c0 = arith.constant 0 : index
    %c0_0 = arith.constant 0 : index
    %0 = vector.load %arg1[%c0, %c0_0] : memref<16x128xf32, #tpu.memory_space<vmem>>, vector<16x128xf32>
    %c0_1 = arith.constant 0 : index
    %c0_2 = arith.constant 0 : index
    %1 = vector.load %arg2[%c0_1, %c0_2] : memref<128x128xf32, #tpu.memory_space<vmem>>, vector<128x128xf32>
    %cst = arith.constant dense<0.000000e+00> : vector<16x128xf32>
    %2 = tpu.matmul %0, %1, %cst {dimension_numbers = #tpu.dot_dimension_numbers<[1], [0], [0], [1], [0, 0, 1, 1], [], []>} : vector<16x128xf32>, vector<128x128xf32>, vector<16x128xf32> -> vector<16x128xf32>
    %c0_3 = arith.constant 0 : index
    %c0_4 = arith.constant 0 : index
    %3 = vector.load %arg3[%c0_3, %c0_4] : memref<1x128xf32, #tpu.memory_space<vmem>>, vector<1x128xf32>
    %4 = vector.broadcast %3 : vector<1x128xf32> to vector<16x128xf32>
    %5 = arith.addf %2, %4 : vector<16x128xf32>
    %cst_5 = arith.constant 0.000000e+00 : f32
    %6 = vector.broadcast %cst_5 : f32 to vector<16x128xf32>
    %7 = arith.maximumf %5, %6 : vector<16x128xf32>
    %c0_6 = arith.constant 0 : index
    %c0_7 = arith.constant 0 : index
    %8 = vector.load %arg4[%c0_6, %c0_7] : memref<128x128xf32, #tpu.memory_space<vmem>>, vector<128x128xf32>
    %cst_8 = arith.constant dense<0.000000e+00> : vector<16x128xf32>
    %9 = tpu.matmul %7, %8, %cst_8 {dimension_numbers = #tpu.dot_dimension_numbers<[1], [0], [0], [1], [0, 0, 1, 1], [], []>} : vector<16x128xf32>, vector<128x128xf32>, vector<16x128xf32> -> vector<16x128xf32>
    %c0_9 = arith.constant 0 : index
    %c0_10 = arith.constant 0 : index
    %10 = vector.load %arg6[%c0_9, %c0_10] : memref<16x128xf32, #tpu.memory_space<vmem>>, vector<16x128xf32>
    tpu.vector_store %arg6[%c0_9, %c0_10], %9 {strides = array<i32>} : memref<16x128xf32, #tpu.memory_space<vmem>>, vector<16x128xf32>,
    %c0_11 = arith.constant 0 : index
    %c0_12 = arith.constant 0 : index
    %11 = vector.load %arg5[%c0_11, %c0_12] : memref<128x128xf32, #tpu.memory_space<vmem>>, vector<128x128xf32>
    %cst_13 = arith.constant dense<0.000000e+00> : vector<16x128xf32>
    %12 = tpu.matmul %7, %11, %cst_13 {dimension_numbers = #tpu.dot_dimension_numbers<[1], [0], [0], [1], [0, 0, 1, 1], [], []>} : vector<16x128xf32>, vector<128x128xf32>, vector<16x128xf32> -> vector<16x128xf32>
    %c0_14 = arith.constant 0 : index
    %c0_15 = arith.constant 0 : index
    %13 = vector.load %arg7[%c0_14, %c0_15] : memref<16x128xf32, #tpu.memory_space<vmem>>, vector<16x128xf32>
    tpu.vector_store %arg7[%c0_14, %c0_15], %12 {strides = array<i32>} : memref<16x128xf32, #tpu.memory_space<vmem>>, vector<16x128xf32>,
    return
  }
  func.func @transform_0(%arg0: i32) -> (i32, i32) {
    %c0_i32 = arith.constant 0 : i32
    %c0_i32_0 = arith.constant 0 : i32
    return %arg0, %c0_i32 : i32, i32
  }
  func.func @transform_1(%arg0: i32) -> (i32, i32) {
    %c0_i32 = arith.constant 0 : i32
    %c0_i32_0 = arith.constant 0 : i32
    %c0_i32_1 = arith.constant 0 : i32
    return %c0_i32, %c0_i32_0 : i32, i32
  }
  func.func @transform_2(%arg0: i32) -> (i32, i32) {
    %c0_i32 = arith.constant 0 : i32
    %c0_i32_0 = arith.constant 0 : i32
    %c0_i32_1 = arith.constant 0 : i32
    return %c0_i32, %c0_i32_0 : i32, i32
  }
  func.func @transform_3(%arg0: i32) -> (i32, i32) {
    %c0_i32 = arith.constant 0 : i32
    %c0_i32_0 = arith.constant 0 : i32
    %c0_i32_1 = arith.constant 0 : i32
    return %c0_i32, %c0_i32_0 : i32, i32
  }
  func.func @transform_4(%arg0: i32) -> (i32, i32) {
    %c0_i32 = arith.constant 0 : i32
    %c0_i32_0 = arith.constant 0 : i32
    %c0_i32_1 = arith.constant 0 : i32
    return %c0_i32, %c0_i32_0 : i32, i32
  }
  func.func @transform_5(%arg0: i32) -> (i32, i32) {
    %c0_i32 = arith.constant 0 : i32
    %c0_i32_0 = arith.constant 0 : i32
    return %arg0, %c0_i32 : i32, i32
  }
  func.func @transform_6(%arg0: i32) -> (i32, i32) {
    %c0_i32 = arith.constant 0 : i32
    %c0_i32_0 = arith.constant 0 : i32
    return %arg0, %c0_i32 : i32, i32
  }
}

module attributes {stable_mosaic.version = 11 : i64} {
  func.func @_edge_side_kernel(%arg0: i32, %arg1: memref<32x128xf32, #tpu.memory_space<vmem>>, %arg2: memref<32x128xf32, #tpu.memory_space<vmem>>, %arg3: memref<32x128xf32, #tpu.memory_space<vmem>>, %arg4: memref<128x128xf32, #tpu.memory_space<vmem>>, %arg5: memref<1x128xf32, #tpu.memory_space<vmem>>, %arg6: memref<128x128xf32, #tpu.memory_space<vmem>>, %arg7: memref<1x128xf32, #tpu.memory_space<vmem>>, %arg8: memref<128x128xf32, #tpu.memory_space<vmem>>, %arg9: memref<1x128xf32, #tpu.memory_space<vmem>>, %arg10: memref<32x128xf32, #tpu.memory_space<vmem>>) attributes {dimension_semantics = [#tpu.dimension_semantics<parallel>], iteration_bounds = array<i64: 1>, scalar_prefetch = 0 : i64, scratch_operands = 0 : i64, tpu.core_type = #tpu.core_type<tc>, window_params = [{transform_indices = @transform_0, window_bounds = array<i64: 32, 128>}, {transform_indices = @transform_1, window_bounds = array<i64: 32, 128>}, {transform_indices = @transform_2, window_bounds = array<i64: 32, 128>}, {pipeline_mode = #tpu.pipeline_mode<synchronous>, transform_indices = @transform_3, window_bounds = array<i64: 128, 128>}, {pipeline_mode = #tpu.pipeline_mode<synchronous>, transform_indices = @transform_4, window_bounds = array<i64: 1, 128>}, {pipeline_mode = #tpu.pipeline_mode<synchronous>, transform_indices = @transform_5, window_bounds = array<i64: 128, 128>}, {pipeline_mode = #tpu.pipeline_mode<synchronous>, transform_indices = @transform_6, window_bounds = array<i64: 1, 128>}, {pipeline_mode = #tpu.pipeline_mode<synchronous>, transform_indices = @transform_7, window_bounds = array<i64: 128, 128>}, {pipeline_mode = #tpu.pipeline_mode<synchronous>, transform_indices = @transform_8, window_bounds = array<i64: 1, 128>}, {transform_indices = @transform_9, window_bounds = array<i64: 32, 128>}]} {
    %c0 = arith.constant 0 : index
    %c0_0 = arith.constant 0 : index
    %0 = vector.load %arg1[%c0, %c0_0] : memref<32x128xf32, #tpu.memory_space<vmem>>, vector<32x128xf32>
    %c0_1 = arith.constant 0 : index
    %c0_2 = arith.constant 0 : index
    %1 = vector.load %arg4[%c0_1, %c0_2] : memref<128x128xf32, #tpu.memory_space<vmem>>, vector<128x128xf32>
    %cst = arith.constant dense<0.000000e+00> : vector<32x128xf32>
    %2 = tpu.matmul %0, %1, %cst {dimension_numbers = #tpu.dot_dimension_numbers<[1], [0], [0], [1], [0, 0, 1, 1], [], []>} : vector<32x128xf32>, vector<128x128xf32>, vector<32x128xf32> -> vector<32x128xf32>
    %c0_3 = arith.constant 0 : index
    %c0_4 = arith.constant 0 : index
    %3 = vector.load %arg5[%c0_3, %c0_4] : memref<1x128xf32, #tpu.memory_space<vmem>>, vector<1x128xf32>
    %4 = vector.broadcast %3 : vector<1x128xf32> to vector<32x128xf32>
    %5 = arith.addf %2, %4 : vector<32x128xf32>
    %cst_5 = arith.constant 0.000000e+00 : f32
    %6 = vector.broadcast %cst_5 : f32 to vector<32x128xf32>
    %7 = arith.maximumf %5, %6 : vector<32x128xf32>
    %c0_6 = arith.constant 0 : index
    %c0_7 = arith.constant 0 : index
    %8 = vector.load %arg2[%c0_6, %c0_7] : memref<32x128xf32, #tpu.memory_space<vmem>>, vector<32x128xf32>
    %c0_8 = arith.constant 0 : index
    %c0_9 = arith.constant 0 : index
    %9 = vector.load %arg3[%c0_8, %c0_9] : memref<32x128xf32, #tpu.memory_space<vmem>>, vector<32x128xf32>
    %10 = arith.addf %8, %9 : vector<32x128xf32>
    %c0_10 = arith.constant 0 : index
    %c0_11 = arith.constant 0 : index
    %11 = vector.load %arg7[%c0_10, %c0_11] : memref<1x128xf32, #tpu.memory_space<vmem>>, vector<1x128xf32>
    %12 = vector.broadcast %11 : vector<1x128xf32> to vector<32x128xf32>
    %13 = arith.addf %10, %12 : vector<32x128xf32>
    %c0_12 = arith.constant 0 : index
    %c0_13 = arith.constant 0 : index
    %14 = vector.load %arg6[%c0_12, %c0_13] : memref<128x128xf32, #tpu.memory_space<vmem>>, vector<128x128xf32>
    %cst_14 = arith.constant dense<0.000000e+00> : vector<32x128xf32>
    %15 = tpu.matmul %7, %14, %cst_14 {dimension_numbers = #tpu.dot_dimension_numbers<[1], [0], [0], [1], [0, 0, 1, 1], [], []>} : vector<32x128xf32>, vector<128x128xf32>, vector<32x128xf32> -> vector<32x128xf32>
    %16 = arith.addf %13, %15 : vector<32x128xf32>
    %cst_15 = arith.constant 0.000000e+00 : f32
    %17 = vector.broadcast %cst_15 : f32 to vector<32x128xf32>
    %18 = arith.maximumf %16, %17 : vector<32x128xf32>
    %c0_16 = arith.constant 0 : index
    %c0_17 = arith.constant 0 : index
    %19 = vector.load %arg8[%c0_16, %c0_17] : memref<128x128xf32, #tpu.memory_space<vmem>>, vector<128x128xf32>
    %cst_18 = arith.constant dense<0.000000e+00> : vector<32x128xf32>
    %20 = tpu.matmul %18, %19, %cst_18 {dimension_numbers = #tpu.dot_dimension_numbers<[1], [0], [0], [1], [0, 0, 1, 1], [], []>} : vector<32x128xf32>, vector<128x128xf32>, vector<32x128xf32> -> vector<32x128xf32>
    %c0_19 = arith.constant 0 : index
    %c0_20 = arith.constant 0 : index
    %21 = vector.load %arg9[%c0_19, %c0_20] : memref<1x128xf32, #tpu.memory_space<vmem>>, vector<1x128xf32>
    %22 = vector.broadcast %21 : vector<1x128xf32> to vector<32x128xf32>
    %23 = arith.addf %20, %22 : vector<32x128xf32>
    %c0_21 = arith.constant 0 : index
    %c0_22 = arith.constant 0 : index
    %24 = vector.load %arg10[%c0_21, %c0_22] : memref<32x128xf32, #tpu.memory_space<vmem>>, vector<32x128xf32>
    tpu.vector_store %arg10[%c0_21, %c0_22], %23 {strides = array<i32>} : memref<32x128xf32, #tpu.memory_space<vmem>>, vector<32x128xf32>,
    return
  }
  func.func @transform_0(%arg0: i32) -> (i32, i32) {
    %c0_i32 = arith.constant 0 : i32
    %c0_i32_0 = arith.constant 0 : i32
    return %arg0, %c0_i32 : i32, i32
  }
  func.func @transform_1(%arg0: i32) -> (i32, i32) {
    %c0_i32 = arith.constant 0 : i32
    %c0_i32_0 = arith.constant 0 : i32
    return %arg0, %c0_i32 : i32, i32
  }
  func.func @transform_2(%arg0: i32) -> (i32, i32) {
    %c0_i32 = arith.constant 0 : i32
    %c0_i32_0 = arith.constant 0 : i32
    return %arg0, %c0_i32 : i32, i32
  }
  func.func @transform_3(%arg0: i32) -> (i32, i32) {
    %c0_i32 = arith.constant 0 : i32
    %c0_i32_0 = arith.constant 0 : i32
    %c0_i32_1 = arith.constant 0 : i32
    return %c0_i32, %c0_i32_0 : i32, i32
  }
  func.func @transform_4(%arg0: i32) -> (i32, i32) {
    %c0_i32 = arith.constant 0 : i32
    %c0_i32_0 = arith.constant 0 : i32
    %c0_i32_1 = arith.constant 0 : i32
    return %c0_i32, %c0_i32_0 : i32, i32
  }
  func.func @transform_5(%arg0: i32) -> (i32, i32) {
    %c0_i32 = arith.constant 0 : i32
    %c0_i32_0 = arith.constant 0 : i32
    %c0_i32_1 = arith.constant 0 : i32
    return %c0_i32, %c0_i32_0 : i32, i32
  }
  func.func @transform_6(%arg0: i32) -> (i32, i32) {
    %c0_i32 = arith.constant 0 : i32
    %c0_i32_0 = arith.constant 0 : i32
    %c0_i32_1 = arith.constant 0 : i32
    return %c0_i32, %c0_i32_0 : i32, i32
  }
  func.func @transform_7(%arg0: i32) -> (i32, i32) {
    %c0_i32 = arith.constant 0 : i32
    %c0_i32_0 = arith.constant 0 : i32
    %c0_i32_1 = arith.constant 0 : i32
    return %c0_i32, %c0_i32_0 : i32, i32
  }
  func.func @transform_8(%arg0: i32) -> (i32, i32) {
    %c0_i32 = arith.constant 0 : i32
    %c0_i32_0 = arith.constant 0 : i32
    %c0_i32_1 = arith.constant 0 : i32
    return %c0_i32, %c0_i32_0 : i32, i32
  }
  func.func @transform_9(%arg0: i32) -> (i32, i32) {
    %c0_i32 = arith.constant 0 : i32
    %c0_i32_0 = arith.constant 0 : i32
    return %arg0, %c0_i32 : i32, i32
  }
}

module attributes {stable_mosaic.version = 11 : i64} {
  func.func @_node_update_kernel(%arg0: i32, %arg1: memref<16x128xf32, #tpu.memory_space<vmem>>, %arg2: memref<128x128xf32, #tpu.memory_space<vmem>>, %arg3: memref<1x128xf32, #tpu.memory_space<vmem>>, %arg4: memref<128x128xf32, #tpu.memory_space<vmem>>, %arg5: memref<1x128xf32, #tpu.memory_space<vmem>>, %arg6: memref<128x128xf32, #tpu.memory_space<vmem>>, %arg7: memref<1x128xf32, #tpu.memory_space<vmem>>, %arg8: memref<16x128xf32, #tpu.memory_space<vmem>>) attributes {dimension_semantics = [#tpu.dimension_semantics<parallel>], iteration_bounds = array<i64: 1>, scalar_prefetch = 0 : i64, scratch_operands = 0 : i64, tpu.core_type = #tpu.core_type<tc>, window_params = [{transform_indices = @transform_0, window_bounds = array<i64: 16, 128>}, {pipeline_mode = #tpu.pipeline_mode<synchronous>, transform_indices = @transform_1, window_bounds = array<i64: 128, 128>}, {pipeline_mode = #tpu.pipeline_mode<synchronous>, transform_indices = @transform_2, window_bounds = array<i64: 1, 128>}, {pipeline_mode = #tpu.pipeline_mode<synchronous>, transform_indices = @transform_3, window_bounds = array<i64: 128, 128>}, {pipeline_mode = #tpu.pipeline_mode<synchronous>, transform_indices = @transform_4, window_bounds = array<i64: 1, 128>}, {pipeline_mode = #tpu.pipeline_mode<synchronous>, transform_indices = @transform_5, window_bounds = array<i64: 128, 128>}, {pipeline_mode = #tpu.pipeline_mode<synchronous>, transform_indices = @transform_6, window_bounds = array<i64: 1, 128>}, {transform_indices = @transform_7, window_bounds = array<i64: 16, 128>}]} {
    %c0 = arith.constant 0 : index
    %c0_0 = arith.constant 0 : index
    %0 = vector.load %arg1[%c0, %c0_0] : memref<16x128xf32, #tpu.memory_space<vmem>>, vector<16x128xf32>
    %c0_1 = arith.constant 0 : index
    %c0_2 = arith.constant 0 : index
    %1 = vector.load %arg2[%c0_1, %c0_2] : memref<128x128xf32, #tpu.memory_space<vmem>>, vector<128x128xf32>
    %cst = arith.constant dense<0.000000e+00> : vector<16x128xf32>
    %2 = tpu.matmul %0, %1, %cst {dimension_numbers = #tpu.dot_dimension_numbers<[1], [0], [0], [1], [0, 0, 1, 1], [], []>} : vector<16x128xf32>, vector<128x128xf32>, vector<16x128xf32> -> vector<16x128xf32>
    %c0_3 = arith.constant 0 : index
    %c0_4 = arith.constant 0 : index
    %3 = vector.load %arg3[%c0_3, %c0_4] : memref<1x128xf32, #tpu.memory_space<vmem>>, vector<1x128xf32>
    %4 = vector.broadcast %3 : vector<1x128xf32> to vector<16x128xf32>
    %5 = arith.addf %2, %4 : vector<16x128xf32>
    %cst_5 = arith.constant 0.000000e+00 : f32
    %6 = vector.broadcast %cst_5 : f32 to vector<16x128xf32>
    %7 = arith.maximumf %5, %6 : vector<16x128xf32>
    %c0_6 = arith.constant 0 : index
    %c0_7 = arith.constant 0 : index
    %8 = vector.load %arg4[%c0_6, %c0_7] : memref<128x128xf32, #tpu.memory_space<vmem>>, vector<128x128xf32>
    %cst_8 = arith.constant dense<0.000000e+00> : vector<16x128xf32>
    %9 = tpu.matmul %7, %8, %cst_8 {dimension_numbers = #tpu.dot_dimension_numbers<[1], [0], [0], [1], [0, 0, 1, 1], [], []>} : vector<16x128xf32>, vector<128x128xf32>, vector<16x128xf32> -> vector<16x128xf32>
    %c0_9 = arith.constant 0 : index
    %c0_10 = arith.constant 0 : index
    %10 = vector.load %arg5[%c0_9, %c0_10] : memref<1x128xf32, #tpu.memory_space<vmem>>, vector<1x128xf32>
    %11 = vector.broadcast %10 : vector<1x128xf32> to vector<16x128xf32>
    %12 = arith.addf %9, %11 : vector<16x128xf32>
    %c0_11 = arith.constant 0 : index
    %c0_12 = arith.constant 0 : index
    %13 = vector.load %arg6[%c0_11, %c0_12] : memref<128x128xf32, #tpu.memory_space<vmem>>, vector<128x128xf32>
    %cst_13 = arith.constant dense<0.000000e+00> : vector<16x128xf32>
    %14 = tpu.matmul %12, %13, %cst_13 {dimension_numbers = #tpu.dot_dimension_numbers<[1], [0], [0], [1], [0, 0, 1, 1], [], []>} : vector<16x128xf32>, vector<128x128xf32>, vector<16x128xf32> -> vector<16x128xf32>
    %c0_14 = arith.constant 0 : index
    %c0_15 = arith.constant 0 : index
    %15 = vector.load %arg7[%c0_14, %c0_15] : memref<1x128xf32, #tpu.memory_space<vmem>>, vector<1x128xf32>
    %16 = vector.broadcast %15 : vector<1x128xf32> to vector<16x128xf32>
    %17 = arith.addf %14, %16 : vector<16x128xf32>
    %c0_16 = arith.constant 0 : index
    %c0_17 = arith.constant 0 : index
    %18 = vector.load %arg8[%c0_16, %c0_17] : memref<16x128xf32, #tpu.memory_space<vmem>>, vector<16x128xf32>
    tpu.vector_store %arg8[%c0_16, %c0_17], %17 {strides = array<i32>} : memref<16x128xf32, #tpu.memory_space<vmem>>, vector<16x128xf32>,
    return
  }
  func.func @transform_0(%arg0: i32) -> (i32, i32) {
    %c0_i32 = arith.constant 0 : i32
    %c0_i32_0 = arith.constant 0 : i32
    return %arg0, %c0_i32 : i32, i32
  }
  func.func @transform_1(%arg0: i32) -> (i32, i32) {
    %c0_i32 = arith.constant 0 : i32
    %c0_i32_0 = arith.constant 0 : i32
    %c0_i32_1 = arith.constant 0 : i32
    return %c0_i32, %c0_i32_0 : i32, i32
  }
  func.func @transform_2(%arg0: i32) -> (i32, i32) {
    %c0_i32 = arith.constant 0 : i32
    %c0_i32_0 = arith.constant 0 : i32
    %c0_i32_1 = arith.constant 0 : i32
    return %c0_i32, %c0_i32_0 : i32, i32
  }
  func.func @transform_3(%arg0: i32) -> (i32, i32) {
    %c0_i32 = arith.constant 0 : i32
    %c0_i32_0 = arith.constant 0 : i32
    %c0_i32_1 = arith.constant 0 : i32
    return %c0_i32, %c0_i32_0 : i32, i32
  }
  func.func @transform_4(%arg0: i32) -> (i32, i32) {
    %c0_i32 = arith.constant 0 : i32
    %c0_i32_0 = arith.constant 0 : i32
    %c0_i32_1 = arith.constant 0 : i32
    return %c0_i32, %c0_i32_0 : i32, i32
  }
  func.func @transform_5(%arg0: i32) -> (i32, i32) {
    %c0_i32 = arith.constant 0 : i32
    %c0_i32_0 = arith.constant 0 : i32
    %c0_i32_1 = arith.constant 0 : i32
    return %c0_i32, %c0_i32_0 : i32, i32
  }
  func.func @transform_6(%arg0: i32) -> (i32, i32) {
    %c0_i32 = arith.constant 0 : i32
    %c0_i32_0 = arith.constant 0 : i32
    %c0_i32_1 = arith.constant 0 : i32
    return %c0_i32, %c0_i32_0 : i32, i32
  }
  func.func @transform_7(%arg0: i32) -> (i32, i32) {
    %c0_i32 = arith.constant 0 : i32
    %c0_i32_0 = arith.constant 0 : i32
    return %arg0, %c0_i32 : i32, i32
  }
}

</mosaic_0001>

<llo_original>
// kernel: kuramoto_forward.3
$region0: #{kuramoto_forward.3}
  #allocation0 [shape = 'u32[]', space=smem, size = 0x4, offset = 0x4, fixed_abs, tag = 'smem constant byte address 0x4 - core index']
  #allocation1 [shape = 'u32[144,128]{1,0:T(1,128)}', space=vmem, size = 0x12000, scoped, tag = 'internal scratch']
  %s0 = inlined_call_operand.vmem [shape: f32[16,128], index: 0, kind: input, shape index: {}]
  %s1 = inlined_call_operand.vmem [shape: f32[128,128], index: 1, kind: input, shape index: {}]
  %s2 = inlined_call_operand.vmem [shape: f32[1,128], index: 2, kind: input, shape index: {}]
  %s3 = inlined_call_operand.hbm [shape: f32[128,128], index: 3, kind: input, shape index: {}]
  %s4 = inlined_call_operand.hbm [shape: f32[128,128], index: 4, kind: input, shape index: {}]
  %s5 = inlined_call_operand.vmem [shape: f32[16,128], index: 5, kind: output, shape index: {0}]
  %s6 = inlined_call_operand.vmem [shape: f32[16,128], index: 6, kind: output, shape index: {1}]
  %7 = xla_tuple %s5, %s6
  %s8 = sld [smem:[#allocation0]]
  $region46: #{kuramoto_forward.3} parent=0
    _
  %s10 = ssub.s32 1, %s8
  %s11 = scalar_select 0, %s10, %s8
  $region1: #{kuramoto_forward.3} parent=0
    #allocation2 [shape = 'u8[65536]{0}', space=vmem, size = 0x10000, scoped, tag = 'input window, operand 3, single buffered']
    #allocation3 [shape = 's32[1]{0}', space=sflag, size = 0x4, scoped, tag = 'scoped memory for kuramoto_forward.3']
    #allocation4 [shape = 'u8[65536]{0}', space=vmem, size = 0x10000, scoped, tag = 'input window, operand 4, single buffered']
    #allocation5 [shape = 's32[1]{0}', space=sflag, size = 0x4, scoped, tag = 'scoped memory for kuramoto_forward.3']
    %12 = vsyncpa [#allocation3], 0
    %13 = vsyncpa [#allocation5], 0
    // Predicated region
    $region2: #{kuramoto_forward.3} parent=1 // pred_check
      _
    $region3: #{kuramoto_forward.3} parent=1 // pred_check_branch
      %15 = sbr.rel (0) target = $region5
    $region4: #{kuramoto_forward.3} parent=1 // pred_region
      _
    $region5: #{kuramoto_forward.3} parent=1 // pred_fallthru
      _
    // Predicated region
    $region6: #{kuramoto_forward.3} parent=1 // pred_check
      _
    $region7: #{kuramoto_forward.3} parent=1 // pred_check_branch
      %17 = sbr.rel (0) target = $region9
    $region8: #{kuramoto_forward.3} parent=1 // pred_region
      _
    $region9: #{kuramoto_forward.3} parent=1 // pred_fallthru
      _
    // Predicated region
    $region10: #{kuramoto_forward.3} parent=1 // pred_check
      _
    $region11: #{kuramoto_forward.3} parent=1 // pred_check_branch
      %19 = sbr.rel (0) target = $region13
    $region12: #{kuramoto_forward.3} parent=1 // pred_region
      _
    $region13: #{kuramoto_forward.3} parent=1 // pred_fallthru
      _
    // Predicated region
    $region14: #{kuramoto_forward.3} parent=1 // pred_check
      _
    $region15: #{kuramoto_forward.3} parent=1 // pred_check_branch
      %21 = sbr.rel (0) target = $region17
    $region16: #{kuramoto_forward.3} parent=1 // pred_region
      %s23 = ssub.s32 2048, 2048
      %24 = vsyncadd [#allocation3], %s23
      %s25 = sshll.u32 [#allocation2], 4
      %s26 = int_to_ptr.vmem [resolvable:$true] %s25
      %31 = dma.hbm_to_vmem [thread:$0]  %s3, 2048, %s26, [#allocation3], 128, 128, 8
    $region17: #{kuramoto_forward.3} parent=1 // pred_fallthru
      _
    // Predicated region
    $region18: #{kuramoto_forward.3} parent=1 // pred_check
      _
    $region19: #{kuramoto_forward.3} parent=1 // pred_check_branch
      %33 = sbr.rel (0) target = $region21
    $region20: #{kuramoto_forward.3} parent=1 // pred_region
      %s35 = ssub.s32 2048, 2048
      %36 = vsyncadd [#allocation5], %s35
      %s37 = sshll.u32 [#allocation4], 4
      %s38 = int_to_ptr.vmem [resolvable:$true] %s37
      %43 = dma.hbm_to_vmem [thread:$0]  %s4, 2048, %s38, [#allocation5], 128, 128, 8
    $region21: #{kuramoto_forward.3} parent=1 // pred_fallthru
      _
    // Predicated region
    $region22: #{kuramoto_forward.3} parent=1 // pred_check
      _
    $region23: #{kuramoto_forward.3} parent=1 // pred_check_branch
      %45 = sbr.rel (0) target = $region25
    $region24: #{kuramoto_forward.3} parent=1 // pred_region
      %46 = dma.done [#allocation3], 2048
    $region25: #{kuramoto_forward.3} parent=1 // pred_fallthru
      _
    // Predicated region
    $region26: #{kuramoto_forward.3} parent=1 // pred_check
      _
    $region27: #{kuramoto_forward.3} parent=1 // pred_check_branch
      %48 = sbr.rel (0) target = $region29
    $region28: #{kuramoto_forward.3} parent=1 // pred_region
      %49 = dma.done [#allocation5], 2048
    $region29: #{kuramoto_forward.3} parent=1 // pred_fallthru
      _
    %v50 = vld [vmem:[%s0] sm:$0xff]
    %v51 = vld [vmem:[%s0 + $0x8] sm:$0xff]
    %v52 = vld [vmem:[%s1] sm:$0xff]
    %v53 = vld [vmem:[%s1 + $0x8] sm:$0xff]
    %v54 = vld [vmem:[%s1 + $0x10] sm:$0xff]
    %v55 = vld [vmem:[%s1 + $0x18] sm:$0xff]
    %v56 = vld [vmem:[%s1 + $0x20] sm:$0xff]
    %v57 = vld [vmem:[%s1 + $0x28] sm:$0xff]
    %v58 = vld [vmem:[%s1 + $0x30] sm:$0xff]
    %v59 = vld [vmem:[%s1 + $0x38] sm:$0xff]
    %v60 = vld [vmem:[%s1 + $0x40] sm:$0xff]
    %v61 = vld [vmem:[%s1 + $0x48] sm:$0xff]
    %v62 = vld [vmem:[%s1 + $0x50] sm:$0xff]
    %v63 = vld [vmem:[%s1 + $0x58] sm:$0xff]
    %v64 = vld [vmem:[%s1 + $0x60] sm:$0xff]
    %v65 = vld [vmem:[%s1 + $0x68] sm:$0xff]
    %v66 = vld [vmem:[%s1 + $0x70] sm:$0xff]
    %v67 = vld [vmem:[%s1 + $0x78] sm:$0xff]
    %v68 = vld [vmem:[%s2] sm:$0x1]
    %v70 = vlaneseq
    %v71 = vshrl.u32 %v70, 7
    %v72 = vsub.s32 0, %v71
    %v73 = vrot.slane %v68, %v72
    %75 = vmatprep.subr.mxu0 0.0
    %76 = vmatpush1.msra.mxu0 %v52
    %77 = vmatprep.subr.mxu0 0.0
    %78 = vmatpush1.msra.mxu0 %v53
    %79 = vmatprep.subr.mxu0 0.0
    %80 = vmatpush1.msra.mxu0 %v54
    %81 = vmatprep.subr.mxu0 0.0
    %82 = vmatpush1.msra.mxu0 %v55
    %83 = vmatprep.subr.mxu0 0.0
    %84 = vmatpush1.msra.mxu0 %v56
    %85 = vmatprep.subr.mxu0 0.0
    %86 = vmatpush1.msra.mxu0 %v57
    %87 = vmatprep.subr.mxu0 0.0
    %88 = vmatpush1.msra.mxu0 %v58
    %89 = vmatprep.subr.mxu0 0.0
    %90 = vmatpush1.msra.mxu0 %v59
    %91 = vmatprep.subr.mxu0 0.0
    %92 = vmatpush1.msra.mxu0 %v60
    %93 = vmatprep.subr.mxu0 0.0
    %94 = vmatpush1.msra.mxu0 %v61
    %95 = vmatprep.subr.mxu0 0.0
    %96 = vmatpush1.msra.mxu0 %v62
    %97 = vmatprep.subr.mxu0 0.0
    %98 = vmatpush1.msra.mxu0 %v63
    %99 = vmatprep.subr.mxu0 0.0
    %100 = vmatpush1.msra.mxu0 %v64
    %101 = vmatprep.subr.mxu0 0.0
    %102 = vmatpush1.msra.mxu0 %v65
    %103 = vmatprep.subr.mxu0 0.0
    %104 = vmatpush1.msra.mxu0 %v66
    %105 = vmatprep.subr.mxu0 0.0
    %106 = vmatpush1.msra.mxu0 %v67
    %107 = vmatprep.subr.mxu0 0.0
    %108 = vmatpush1.msra.mxu0 0.0
    %109 = vmatprep.subr.mxu0 0.0
    %110 = vmatpush1.msra.mxu0 0.0
    %111 = vmatprep.subr.mxu0 0.0
    %112 = vmatpush1.msra.mxu0 0.0
    %113 = vmatprep.subr.mxu0 0.0
    %114 = vmatpush1.msra.mxu0 0.0
    %115 = vmatprep.subr.mxu0 0.0
    %116 = vmatpush1.msra.mxu0 0.0
    %117 = vmatprep.subr.mxu0 0.0
    %118 = vmatpush1.msra.mxu0 0.0
    %119 = vmatprep.subr.mxu0 0.0
    %120 = vmatpush1.msra.mxu0 0.0
    %121 = vmatprep.subr.mxu0 0.0
    %122 = vmatpush1.msra.mxu0 0.0
    %123 = vmatprep.subr.mxu0 0.0
    %124 = vmatpush1.msra.mxu0 0.0
    %125 = vmatprep.subr.mxu0 0.0
    %126 = vmatpush1.msra.mxu0 0.0
    %127 = vmatprep.subr.mxu0 0.0
    %128 = vmatpush1.msra.mxu0 0.0
    %129 = vmatprep.subr.mxu0 0.0
    %130 = vmatpush1.msra.mxu0 0.0
    %131 = vmatprep.subr.mxu0 0.0
    %132 = vmatpush1.msra.mxu0 0.0
    %133 = vmatprep.subr.mxu0 0.0
    %134 = vmatpush1.msra.mxu0 0.0
    %135 = vmatprep.subr.mxu0 0.0
    %136 = vmatpush1.msra.mxu0 0.0
    %137 = vmatprep.subr.mxu0 0.0
    %138 = vmatpush1.msra.mxu0 0.0
    %139 = vmatprep.mubr.f32.mxu0 0.0
    %140 = vmatmul.mubr.f32.gmra.mrb[0].mxu0 %v50
    %v141 = vpop.f32.mrb[0].mxu0
    %v142 = vadd.f32 %v73, %v141
    %v143 = vpop.f32.mrb[0].mxu0
    %144 = vmatprep.mubr.f32.mxu0 0.0
    %145 = vmatmul.mubr.f32.gmra.mrb[0].mxu0 %v51
    %v146 = vpop.f32.mrb[0].mxu0
    %v147 = vadd.f32 %v73, %v146
    %v148 = vpop.f32.mrb[0].mxu0
    %149 = vdwg.mxu0
    %v150 = vmax.f32 %v142, 0.0
    %v151 = vmax.f32 %v147, 0.0
    %v152 = vld [vmem:[#allocation2] sm:$0xff]
    %v153 = vld [vmem:[#allocation2 + $0x8] sm:$0xff]
    %v154 = vld [vmem:[#allocation2 + $0x10] sm:$0xff]
    %v155 = vld [vmem:[#allocation2 + $0x18] sm:$0xff]
    %v156 = vld [vmem:[#allocation2 + $0x20] sm:$0xff]
    %v157 = vld [vmem:[#allocation2 + $0x28] sm:$0xff]
    %v158 = vld [vmem:[#allocation2 + $0x30] sm:$0xff]
    %v159 = vld [vmem:[#allocation2 + $0x38] sm:$0xff]
    %v160 = vld [vmem:[#allocation2 + $0x40] sm:$0xff]
    %v161 = vld [vmem:[#allocation2 + $0x48] sm:$0xff]
    %v162 = vld [vmem:[#allocation2 + $0x50] sm:$0xff]
    %v163 = vld [vmem:[#allocation2 + $0x58] sm:$0xff]
    %v164 = vld [vmem:[#allocation2 + $0x60] sm:$0xff]
    %v165 = vld [vmem:[#allocation2 + $0x68] sm:$0xff]
    %v166 = vld [vmem:[#allocation2 + $0x70] sm:$0xff]
    %v167 = vld [vmem:[#allocation2 + $0x78] sm:$0xff]
    %168 = vmatprep.subr.mxu0 0.0
    %169 = vmatpush1.msra.mxu0 %v152
    %170 = vmatprep.subr.mxu0 0.0
    %171 = vmatpush1.msra.mxu0 %v153
    %172 = vmatprep.subr.mxu0 0.0
    %173 = vmatpush1.msra.mxu0 %v154
    %174 = vmatprep.subr.mxu0 0.0
    %175 = vmatpush1.msra.mxu0 %v155
    %176 = vmatprep.subr.mxu0 0.0
    %177 = vmatpush1.msra.mxu0 %v156
    %178 = vmatprep.subr.mxu0 0.0
    %179 = vmatpush1.msra.mxu0 %v157
    %180 = vmatprep.subr.mxu0 0.0
    %181 = vmatpush1.msra.mxu0 %v158
    %182 = vmatprep.subr.mxu0 0.0
    %183 = vmatpush1.msra.mxu0 %v159
    %184 = vmatprep.subr.mxu0 0.0
    %185 = vmatpush1.msra.mxu0 %v160
    %186 = vmatprep.subr.mxu0 0.0
    %187 = vmatpush1.msra.mxu0 %v161
    %188 = vmatprep.subr.mxu0 0.0
    %189 = vmatpush1.msra.mxu0 %v162
    %190 = vmatprep.subr.mxu0 0.0
    %191 = vmatpush1.msra.mxu0 %v163
    %192 = vmatprep.subr.mxu0 0.0
    %193 = vmatpush1.msra.mxu0 %v164
    %194 = vmatprep.subr.mxu0 0.0
    %195 = vmatpush1.msra.mxu0 %v165
    %196 = vmatprep.subr.mxu0 0.0
    %197 = vmatpush1.msra.mxu0 %v166
    %198 = vmatprep.subr.mxu0 0.0
    %199 = vmatpush1.msra.mxu0 %v167
    %200 = vmatprep.subr.mxu0 0.0
    %201 = vmatpush1.msra.mxu0 0.0
    %202 = vmatprep.subr.mxu0 0.0
    %203 = vmatpush1.msra.mxu0 0.0
    %204 = vmatprep.subr.mxu0 0.0
    %205 = vmatpush1.msra.mxu0 0.0
    %206 = vmatprep.subr.mxu0 0.0
    %207 = vmatpush1.msra.mxu0 0.0
    %208 = vmatprep.subr.mxu0 0.0
    %209 = vmatpush1.msra.mxu0 0.0
    %210 = vmatprep.subr.mxu0 0.0
    %211 = vmatpush1.msra.mxu0 0.0
    %212 = vmatprep.subr.mxu0 0.0
    %213 = vmatpush1.msra.mxu0 0.0
    %214 = vmatprep.subr.mxu0 0.0
    %215 = vmatpush1.msra.mxu0 0.0
    %216 = vmatprep.subr.mxu0 0.0
    %217 = vmatpush1.msra.mxu0 0.0
    %218 = vmatprep.subr.mxu0 0.0
    %219 = vmatpush1.msra.mxu0 0.0
    %220 = vmatprep.subr.mxu0 0.0
    %221 = vmatpush1.msra.mxu0 0.0
    %222 = vmatprep.subr.mxu0 0.0
    %223 = vmatpush1.msra.mxu0 0.0
    %224 = vmatprep.subr.mxu0 0.0
    %225 = vmatpush1.msra.mxu0 0.0
    %226 = vmatprep.subr.mxu0 0.0
    %227 = vmatpush1.msra.mxu0 0.0
    %228 = vmatprep.subr.mxu0 0.0
    %229 = vmatpush1.msra.mxu0 0.0
    %230 = vmatprep.subr.mxu0 0.0
    %231 = vmatpush1.msra.mxu0 0.0
    %232 = vmatprep.mubr.f32.mxu0 0.0
    %233 = vmatmul.mubr.f32.gmra.mrb[0].mxu0 %v150
    %v234 = vpop.f32.mrb[0].mxu0
    %v235 = vadd.f32 0.0, %v234
    %v236 = vpop.f32.mrb[0].mxu0
    %237 = vmatprep.mubr.f32.mxu0 0.0
    %238 = vmatmul.mubr.f32.gmra.mrb[0].mxu0 %v151
    %v239 = vpop.f32.mrb[0].mxu0
    %v240 = vadd.f32 0.0, %v239
    %v241 = vpop.f32.mrb[0].mxu0
    %242 = vdwg.mxu0
    %243 = vst [vmem:[%s5] sm:$0xff] %v235
    %244 = vst [vmem:[%s5 + $0x8] sm:$0xff] %v240
    %v245 = vld [vmem:[#allocation4] sm:$0xff]
    %v246 = vld [vmem:[#allocation4 + $0x8] sm:$0xff]
    %v247 = vld [vmem:[#allocation4 + $0x10] sm:$0xff]
    %v248 = vld [vmem:[#allocation4 + $0x18] sm:$0xff]
    %v249 = vld [vmem:[#allocation4 + $0x20] sm:$0xff]
    %v250 = vld [vmem:[#allocation4 + $0x28] sm:$0xff]
    %v251 = vld [vmem:[#allocation4 + $0x30] sm:$0xff]
    %v252 = vld [vmem:[#allocation4 + $0x38] sm:$0xff]
    %v253 = vld [vmem:[#allocation4 + $0x40] sm:$0xff]
    %v254 = vld [vmem:[#allocation4 + $0x48] sm:$0xff]
    %v255 = vld [vmem:[#allocation4 + $0x50] sm:$0xff]
    %v256 = vld [vmem:[#allocation4 + $0x58] sm:$0xff]
    %v257 = vld [vmem:[#allocation4 + $0x60] sm:$0xff]
    %v258 = vld [vmem:[#allocation4 + $0x68] sm:$0xff]
    %v259 = vld [vmem:[#allocation4 + $0x70] sm:$0xff]
    %v260 = vld [vmem:[#allocation4 + $0x78] sm:$0xff]
    %261 = vmatprep.subr.mxu0 0.0
    %262 = vmatpush1.msra.mxu0 %v245
    %263 = vmatprep.subr.mxu0 0.0
    %264 = vmatpush1.msra.mxu0 %v246
    %265 = vmatprep.subr.mxu0 0.0
    %266 = vmatpush1.msra.mxu0 %v247
    %267 = vmatprep.subr.mxu0 0.0
    %268 = vmatpush1.msra.mxu0 %v248
    %269 = vmatprep.subr.mxu0 0.0
    %270 = vmatpush1.msra.mxu0 %v249
    %271 = vmatprep.subr.mxu0 0.0
    %272 = vmatpush1.msra.mxu0 %v250
    %273 = vmatprep.subr.mxu0 0.0
    %274 = vmatpush1.msra.mxu0 %v251
    %275 = vmatprep.subr.mxu0 0.0
    %276 = vmatpush1.msra.mxu0 %v252
    %277 = vmatprep.subr.mxu0 0.0
    %278 = vmatpush1.msra.mxu0 %v253
    %279 = vmatprep.subr.mxu0 0.0
    %280 = vmatpush1.msra.mxu0 %v254
    %281 = vmatprep.subr.mxu0 0.0
    %282 = vmatpush1.msra.mxu0 %v255
    %283 = vmatprep.subr.mxu0 0.0
    %284 = vmatpush1.msra.mxu0 %v256
    %285 = vmatprep.subr.mxu0 0.0
    %286 = vmatpush1.msra.mxu0 %v257
    %287 = vmatprep.subr.mxu0 0.0
    %288 = vmatpush1.msra.mxu0 %v258
    %289 = vmatprep.subr.mxu0 0.0
    %290 = vmatpush1.msra.mxu0 %v259
    %291 = vmatprep.subr.mxu0 0.0
    %292 = vmatpush1.msra.mxu0 %v260
    %293 = vmatprep.subr.mxu0 0.0
    %294 = vmatpush1.msra.mxu0 0.0
    %295 = vmatprep.subr.mxu0 0.0
    %296 = vmatpush1.msra.mxu0 0.0
    %297 = vmatprep.subr.mxu0 0.0
    %298 = vmatpush1.msra.mxu0 0.0
    %299 = vmatprep.subr.mxu0 0.0
    %300 = vmatpush1.msra.mxu0 0.0
    %301 = vmatprep.subr.mxu0 0.0
    %302 = vmatpush1.msra.mxu0 0.0
    %303 = vmatprep.subr.mxu0 0.0
    %304 = vmatpush1.msra.mxu0 0.0
    %305 = vmatprep.subr.mxu0 0.0
    %306 = vmatpush1.msra.mxu0 0.0
    %307 = vmatprep.subr.mxu0 0.0
    %308 = vmatpush1.msra.mxu0 0.0
    %309 = vmatprep.subr.mxu0 0.0
    %310 = vmatpush1.msra.mxu0 0.0
    %311 = vmatprep.subr.mxu0 0.0
    %312 = vmatpush1.msra.mxu0 0.0
    %313 = vmatprep.subr.mxu0 0.0
    %314 = vmatpush1.msra.mxu0 0.0
    %315 = vmatprep.subr.mxu0 0.0
    %316 = vmatpush1.msra.mxu0 0.0
    %317 = vmatprep.subr.mxu0 0.0
    %318 = vmatpush1.msra.mxu0 0.0
    %319 = vmatprep.subr.mxu0 0.0
    %320 = vmatpush1.msra.mxu0 0.0
    %321 = vmatprep.subr.mxu0 0.0
    %322 = vmatpush1.msra.mxu0 0.0
    %323 = vmatprep.subr.mxu0 0.0
    %324 = vmatpush1.msra.mxu0 0.0
    %325 = vmatprep.mubr.f32.mxu0 0.0
    %326 = vmatmul.mubr.f32.gmra.mrb[0].mxu0 %v150
    %v327 = vpop.f32.mrb[0].mxu0
    %v328 = vadd.f32 0.0, %v327
    %v329 = vpop.f32.mrb[0].mxu0
    %330 = vmatprep.mubr.f32.mxu0 0.0
    %331 = vmatmul.mubr.f32.gmra.mrb[0].mxu0 %v151
    %v332 = vpop.f32.mrb[0].mxu0
    %v333 = vadd.f32 0.0, %v332
    %v334 = vpop.f32.mrb[0].mxu0
    %335 = vdwg.mxu0
    %336 = vst [vmem:[%s6] sm:$0xff] %v328
    %337 = vst [vmem:[%s6 + $0x8] sm:$0xff] %v333
    // Predicated region
    $region30: #{kuramoto_forward.3} parent=1 // pred_check
      _
    $region31: #{kuramoto_forward.3} parent=1 // pred_check_branch
      %339 = sbr.rel (0) target = $region33
    $region32: #{kuramoto_forward.3} parent=1 // pred_region
      _
    $region33: #{kuramoto_forward.3} parent=1 // pred_fallthru
      _
    // Predicated region
    $region34: #{kuramoto_forward.3} parent=1 // pred_check
      _
    $region35: #{kuramoto_forward.3} parent=1 // pred_check_branch
      %341 = sbr.rel (0) target = $region37
    $region36: #{kuramoto_forward.3} parent=1 // pred_region
      _
    $region37: #{kuramoto_forward.3} parent=1 // pred_fallthru
      _
    // Predicated region
    $region38: #{kuramoto_forward.3} parent=1 // pred_check
      _
    $region39: #{kuramoto_forward.3} parent=1 // pred_check_branch
      %343 = sbr.rel (0) target = $region41
    $region40: #{kuramoto_forward.3} parent=1 // pred_region
      _
    $region41: #{kuramoto_forward.3} parent=1 // pred_fallthru
      _
    // Predicated region
    $region42: #{kuramoto_forward.3} parent=1 // pred_check
      _
    $region43: #{kuramoto_forward.3} parent=1 // pred_check_branch
      %345 = sbr.rel (0) target = $region45
    $region44: #{kuramoto_forward.3} parent=1 // pred_region
      _
    $region45: #{kuramoto_forward.3} parent=1 // pred_fallthru
      _
    %346 = vsyncpa [#allocation3], 1
    %347 = vsyncpa [#allocation5], 1

// kernel: kuramoto_forward.5
$region0: #{kuramoto_forward.5}
  #allocation0 [shape = 'u32[]', space=smem, size = 0x4, offset = 0x4, fixed_abs, tag = 'smem constant byte address 0x4 - core index']
  #allocation1 [shape = 'u32[144,128]{1,0:T(1,128)}', space=vmem, size = 0x12000, scoped, tag = 'internal scratch']
  %s0 = inlined_call_operand.vmem [shape: f32[16,128], index: 0, kind: input, shape index: {}]
  %s1 = inlined_call_operand.vmem [shape: f32[128,128], index: 1, kind: input, shape index: {}]
  %s2 = inlined_call_operand.vmem [shape: f32[1,128], index: 2, kind: input, shape index: {}]
  %s3 = inlined_call_operand.vmem [shape: f32[128,128], index: 3, kind: input, shape index: {}]
  %s4 = inlined_call_operand.vmem [shape: f32[1,128], index: 4, kind: input, shape index: {}]
  %s5 = inlined_call_operand.vmem [shape: f32[128,128], index: 5, kind: input, shape index: {}]
  %s6 = inlined_call_operand.vmem [shape: f32[1,128], index: 6, kind: input, shape index: {}]
  %s7 = inlined_call_operand.vmem [shape: f32[16,128], index: 7, kind: output, shape index: {}]
  %s8 = sld [smem:[#allocation0]]
  $region38: #{kuramoto_forward.5} parent=0
    _
  %s10 = ssub.s32 1, %s8
  %s11 = scalar_select 0, %s10, %s8
  // Predicated region
  $region2: #{kuramoto_forward.5} parent=0 // pred_check
    _
  $region3: #{kuramoto_forward.5} parent=0 // pred_check_branch
    %13 = sbr.rel (0) target = $region5
  $region4: #{kuramoto_forward.5} parent=0 // pred_region
    _
  $region5: #{kuramoto_forward.5} parent=0 // pred_fallthru
    _
  // Predicated region
  $region6: #{kuramoto_forward.5} parent=0 // pred_check
    _
  $region7: #{kuramoto_forward.5} parent=0 // pred_check_branch
    %15 = sbr.rel (0) target = $region9
  $region8: #{kuramoto_forward.5} parent=0 // pred_region
    _
  $region9: #{kuramoto_forward.5} parent=0 // pred_fallthru
    _
  // Predicated region
  $region10: #{kuramoto_forward.5} parent=0 // pred_check
    _
  $region11: #{kuramoto_forward.5} parent=0 // pred_check_branch
    %17 = sbr.rel (0) target = $region13
  $region12: #{kuramoto_forward.5} parent=0 // pred_region
    _
  $region13: #{kuramoto_forward.5} parent=0 // pred_fallthru
    _
  // Predicated region
  $region14: #{kuramoto_forward.5} parent=0 // pred_check
    _
  $region15: #{kuramoto_forward.5} parent=0 // pred_check_branch
    %19 = sbr.rel (0) target = $region17
  $region16: #{kuramoto_forward.5} parent=0 // pred_region
    _
  $region17: #{kuramoto_forward.5} parent=0 // pred_fallthru
    _
  // Predicated region
  $region18: #{kuramoto_forward.5} parent=0 // pred_check
    _
  $region19: #{kuramoto_forward.5} parent=0 // pred_check_branch
    %21 = sbr.rel (0) target = $region21
  $region20: #{kuramoto_forward.5} parent=0 // pred_region
    _
  $region21: #{kuramoto_forward.5} parent=0 // pred_fallthru
    _
  // Predicated region
  $region22: #{kuramoto_forward.5} parent=0 // pred_check
    _
  $region23: #{kuramoto_forward.5} parent=0 // pred_check_branch
    %23 = sbr.rel (0) target = $region25
  $region24: #{kuramoto_forward.5} parent=0 // pred_region
    _
  $region25: #{kuramoto_forward.5} parent=0 // pred_fallthru
    _
  // Predicated region
  $region26: #{kuramoto_forward.5} parent=0 // pred_check
    _
  $region27: #{kuramoto_forward.5} parent=0 // pred_check_branch
    %25 = sbr.rel (0) target = $region29
  $region28: #{kuramoto_forward.5} parent=0 // pred_region
    _
  $region29: #{kuramoto_forward.5} parent=0 // pred_fallthru
    _
  %v26 = vld [vmem:[%s0] sm:$0xff]
  %v27 = vld [vmem:[%s0 + $0x8] sm:$0xff]
  %v28 = vld [vmem:[%s1] sm:$0xff]
  %v29 = vld [vmem:[%s1 + $0x8] sm:$0xff]
  %v30 = vld [vmem:[%s1 + $0x10] sm:$0xff]
  %v31 = vld [vmem:[%s1 + $0x18] sm:$0xff]
  %v32 = vld [vmem:[%s1 + $0x20] sm:$0xff]
  %v33 = vld [vmem:[%s1 + $0x28] sm:$0xff]
  %v34 = vld [vmem:[%s1 + $0x30] sm:$0xff]
  %v35 = vld [vmem:[%s1 + $0x38] sm:$0xff]
  %v36 = vld [vmem:[%s1 + $0x40] sm:$0xff]
  %v37 = vld [vmem:[%s1 + $0x48] sm:$0xff]
  %v38 = vld [vmem:[%s1 + $0x50] sm:$0xff]
  %v39 = vld [vmem:[%s1 + $0x58] sm:$0xff]
  %v40 = vld [vmem:[%s1 + $0x60] sm:$0xff]
  %v41 = vld [vmem:[%s1 + $0x68] sm:$0xff]
  %v42 = vld [vmem:[%s1 + $0x70] sm:$0xff]
  %v43 = vld [vmem:[%s1 + $0x78] sm:$0xff]
  %v44 = vld [vmem:[%s2] sm:$0x1]
  %v46 = vlaneseq
  %v47 = vshrl.u32 %v46, 7
  %v48 = vsub.s32 0, %v47
  %v49 = vrot.slane %v44, %v48
  %51 = vmatprep.subr.mxu0 0.0
  %52 = vmatpush1.msra.mxu0 %v28
  %53 = vmatprep.subr.mxu0 0.0
  %54 = vmatpush1.msra.mxu0 %v29
  %55 = vmatprep.subr.mxu0 0.0
  %56 = vmatpush1.msra.mxu0 %v30
  %57 = vmatprep.subr.mxu0 0.0
  %58 = vmatpush1.msra.mxu0 %v31
  %59 = vmatprep.subr.mxu0 0.0
  %60 = vmatpush1.msra.mxu0 %v32
  %61 = vmatprep.subr.mxu0 0.0
  %62 = vmatpush1.msra.mxu0 %v33
  %63 = vmatprep.subr.mxu0 0.0
  %64 = vmatpush1.msra.mxu0 %v34
  %65 = vmatprep.subr.mxu0 0.0
  %66 = vmatpush1.msra.mxu0 %v35
  %67 = vmatprep.subr.mxu0 0.0
  %68 = vmatpush1.msra.mxu0 %v36
  %69 = vmatprep.subr.mxu0 0.0
  %70 = vmatpush1.msra.mxu0 %v37
  %71 = vmatprep.subr.mxu0 0.0
  %72 = vmatpush1.msra.mxu0 %v38
  %73 = vmatprep.subr.mxu0 0.0
  %74 = vmatpush1.msra.mxu0 %v39
  %75 = vmatprep.subr.mxu0 0.0
  %76 = vmatpush1.msra.mxu0 %v40
  %77 = vmatprep.subr.mxu0 0.0
  %78 = vmatpush1.msra.mxu0 %v41
  %79 = vmatprep.subr.mxu0 0.0
  %80 = vmatpush1.msra.mxu0 %v42
  %81 = vmatprep.subr.mxu0 0.0
  %82 = vmatpush1.msra.mxu0 %v43
  %83 = vmatprep.subr.mxu0 0.0
  %84 = vmatpush1.msra.mxu0 0.0
  %85 = vmatprep.subr.mxu0 0.0
  %86 = vmatpush1.msra.mxu0 0.0
  %87 = vmatprep.subr.mxu0 0.0
  %88 = vmatpush1.msra.mxu0 0.0
  %89 = vmatprep.subr.mxu0 0.0
  %90 = vmatpush1.msra.mxu0 0.0
  %91 = vmatprep.subr.mxu0 0.0
  %92 = vmatpush1.msra.mxu0 0.0
  %93 = vmatprep.subr.mxu0 0.0
  %94 = vmatpush1.msra.mxu0 0.0
  %95 = vmatprep.subr.mxu0 0.0
  %96 = vmatpush1.msra.mxu0 0.0
  %97 = vmatprep.subr.mxu0 0.0
  %98 = vmatpush1.msra.mxu0 0.0
  %99 = vmatprep.subr.mxu0 0.0
  %100 = vmatpush1.msra.mxu0 0.0
  %101 = vmatprep.subr.mxu0 0.0
  %102 = vmatpush1.msra.mxu0 0.0
  %103 = vmatprep.subr.mxu0 0.0
  %104 = vmatpush1.msra.mxu0 0.0
  %105 = vmatprep.subr.mxu0 0.0
  %106 = vmatpush1.msra.mxu0 0.0
  %107 = vmatprep.subr.mxu0 0.0
  %108 = vmatpush1.msra.mxu0 0.0
  %109 = vmatprep.subr.mxu0 0.0
  %110 = vmatpush1.msra.mxu0 0.0
  %111 = vmatprep.subr.mxu0 0.0
  %112 = vmatpush1.msra.mxu0 0.0
  %113 = vmatprep.subr.mxu0 0.0
  %114 = vmatpush1.msra.mxu0 0.0
  %115 = vmatprep.mubr.f32.mxu0 0.0
  %116 = vmatmul.mubr.f32.gmra.mrb[0].mxu0 %v26
  %v117 = vpop.f32.mrb[0].mxu0
  %v118 = vadd.f32 %v49, %v117
  %v119 = vpop.f32.mrb[0].mxu0
  %120 = vmatprep.mubr.f32.mxu0 0.0
  %121 = vmatmul.mubr.f32.gmra.mrb[0].mxu0 %v27
  %v122 = vpop.f32.mrb[0].mxu0
  %v123 = vadd.f32 %v49, %v122
  %v124 = vpop.f32.mrb[0].mxu0
  %125 = vdwg.mxu0
  %v126 = vmax.f32 %v118, 0.0
  %v127 = vmax.f32 %v123, 0.0
  %v128 = vld [vmem:[%s3] sm:$0xff]
  %v129 = vld [vmem:[%s3 + $0x8] sm:$0xff]
  %v130 = vld [vmem:[%s3 + $0x10] sm:$0xff]
  %v131 = vld [vmem:[%s3 + $0x18] sm:$0xff]
  %v132 = vld [vmem:[%s3 + $0x20] sm:$0xff]
  %v133 = vld [vmem:[%s3 + $0x28] sm:$0xff]
  %v134 = vld [vmem:[%s3 + $0x30] sm:$0xff]
  %v135 = vld [vmem:[%s3 + $0x38] sm:$0xff]
  %v136 = vld [vmem:[%s3 + $0x40] sm:$0xff]
  %v137 = vld [vmem:[%s3 + $0x48] sm:$0xff]
  %v138 = vld [vmem:[%s3 + $0x50] sm:$0xff]
  %v139 = vld [vmem:[%s3 + $0x58] sm:$0xff]
  %v140 = vld [vmem:[%s3 + $0x60] sm:$0xff]
  %v141 = vld [vmem:[%s3 + $0x68] sm:$0xff]
  %v142 = vld [vmem:[%s3 + $0x70] sm:$0xff]
  %v143 = vld [vmem:[%s3 + $0x78] sm:$0xff]
  %v144 = vld [vmem:[%s4] sm:$0x1]
  %v146 = vlaneseq
  %v147 = vshrl.u32 %v146, 7
  %v148 = vsub.s32 0, %v147
  %v149 = vrot.slane %v144, %v148
  %151 = vmatprep.subr.mxu0 0.0
  %152 = vmatpush1.msra.mxu0 %v128
  %153 = vmatprep.subr.mxu0 0.0
  %154 = vmatpush1.msra.mxu0 %v129
  %155 = vmatprep.subr.mxu0 0.0
  %156 = vmatpush1.msra.mxu0 %v130
  %157 = vmatprep.subr.mxu0 0.0
  %158 = vmatpush1.msra.mxu0 %v131
  %159 = vmatprep.subr.mxu0 0.0
  %160 = vmatpush1.msra.mxu0 %v132
  %161 = vmatprep.subr.mxu0 0.0
  %162 = vmatpush1.msra.mxu0 %v133
  %163 = vmatprep.subr.mxu0 0.0
  %164 = vmatpush1.msra.mxu0 %v134
  %165 = vmatprep.subr.mxu0 0.0
  %166 = vmatpush1.msra.mxu0 %v135
  %167 = vmatprep.subr.mxu0 0.0
  %168 = vmatpush1.msra.mxu0 %v136
  %169 = vmatprep.subr.mxu0 0.0
  %170 = vmatpush1.msra.mxu0 %v137
  %171 = vmatprep.subr.mxu0 0.0
  %172 = vmatpush1.msra.mxu0 %v138
  %173 = vmatprep.subr.mxu0 0.0
  %174 = vmatpush1.msra.mxu0 %v139
  %175 = vmatprep.subr.mxu0 0.0
  %176 = vmatpush1.msra.mxu0 %v140
  %177 = vmatprep.subr.mxu0 0.0
  %178 = vmatpush1.msra.mxu0 %v141
  %179 = vmatprep.subr.mxu0 0.0
  %180 = vmatpush1.msra.mxu0 %v142
  %181 = vmatprep.subr.mxu0 0.0
  %182 = vmatpush1.msra.mxu0 %v143
  %183 = vmatprep.subr.mxu0 0.0
  %184 = vmatpush1.msra.mxu0 0.0
  %185 = vmatprep.subr.mxu0 0.0
  %186 = vmatpush1.msra.mxu0 0.0
  %187 = vmatprep.subr.mxu0 0.0
  %188 = vmatpush1.msra.mxu0 0.0
  %189 = vmatprep.subr.mxu0 0.0
  %190 = vmatpush1.msra.mxu0 0.0
  %191 = vmatprep.subr.mxu0 0.0
  %192 = vmatpush1.msra.mxu0 0.0
  %193 = vmatprep.subr.mxu0 0.0
  %194 = vmatpush1.msra.mxu0 0.0
  %195 = vmatprep.subr.mxu0 0.0
  %196 = vmatpush1.msra.mxu0 0.0
  %197 = vmatprep.subr.mxu0 0.0
  %198 = vmatpush1.msra.mxu0 0.0
  %199 = vmatprep.subr.mxu0 0.0
  %200 = vmatpush1.msra.mxu0 0.0
  %201 = vmatprep.subr.mxu0 0.0
  %202 = vmatpush1.msra.mxu0 0.0
  %203 = vmatprep.subr.mxu0 0.0
  %204 = vmatpush1.msra.mxu0 0.0
  %205 = vmatprep.subr.mxu0 0.0
  %206 = vmatpush1.msra.mxu0 0.0
  %207 = vmatprep.subr.mxu0 0.0
  %208 = vmatpush1.msra.mxu0 0.0
  %209 = vmatprep.subr.mxu0 0.0
  %210 = vmatpush1.msra.mxu0 0.0
  %211 = vmatprep.subr.mxu0 0.0
  %212 = vmatpush1.msra.mxu0 0.0
  %213 = vmatprep.subr.mxu0 0.0
  %214 = vmatpush1.msra.mxu0 0.0
  %215 = vmatprep.mubr.f32.mxu0 0.0
  %216 = vmatmul.mubr.f32.gmra.mrb[0].mxu0 %v126
  %v217 = vpop.f32.mrb[0].mxu0
  %v218 = vadd.f32 %v149, %v217
  %v219 = vpop.f32.mrb[0].mxu0
  %220 = vmatprep.mubr.f32.mxu0 0.0
  %221 = vmatmul.mubr.f32.gmra.mrb[0].mxu0 %v127
  %v222 = vpop.f32.mrb[0].mxu0
  %v223 = vadd.f32 %v149, %v222
  %v224 = vpop.f32.mrb[0].mxu0
  %225 = vdwg.mxu0
  %v226 = vld [vmem:[%s5] sm:$0xff]
  %v227 = vld [vmem:[%s5 + $0x8] sm:$0xff]
  %v228 = vld [vmem:[%s5 + $0x10] sm:$0xff]
  %v229 = vld [vmem:[%s5 + $0x18] sm:$0xff]
  %v230 = vld [vmem:[%s5 + $0x20] sm:$0xff]
  %v231 = vld [vmem:[%s5 + $0x28] sm:$0xff]
  %v232 = vld [vmem:[%s5 + $0x30] sm:$0xff]
  %v233 = vld [vmem:[%s5 + $0x38] sm:$0xff]
  %v234 = vld [vmem:[%s5 + $0x40] sm:$0xff]
  %v235 = vld [vmem:[%s5 + $0x48] sm:$0xff]
  %v236 = vld [vmem:[%s5 + $0x50] sm:$0xff]
  %v237 = vld [vmem:[%s5 + $0x58] sm:$0xff]
  %v238 = vld [vmem:[%s5 + $0x60] sm:$0xff]
  %v239 = vld [vmem:[%s5 + $0x68] sm:$0xff]
  %v240 = vld [vmem:[%s5 + $0x70] sm:$0xff]
  %v241 = vld [vmem:[%s5 + $0x78] sm:$0xff]
  %v242 = vld [vmem:[%s6] sm:$0x1]
  %v244 = vlaneseq
  %v245 = vshrl.u32 %v244, 7
  %v246 = vsub.s32 0, %v245
  %v247 = vrot.slane %v242, %v246
  %249 = vmatprep.subr.mxu0 0.0
  %250 = vmatpush1.msra.mxu0 %v226
  %251 = vmatprep.subr.mxu0 0.0
  %252 = vmatpush1.msra.mxu0 %v227
  %253 = vmatprep.subr.mxu0 0.0
  %254 = vmatpush1.msra.mxu0 %v228
  %255 = vmatprep.subr.mxu0 0.0
  %256 = vmatpush1.msra.mxu0 %v229
  %257 = vmatprep.subr.mxu0 0.0
  %258 = vmatpush1.msra.mxu0 %v230
  %259 = vmatprep.subr.mxu0 0.0
  %260 = vmatpush1.msra.mxu0 %v231
  %261 = vmatprep.subr.mxu0 0.0
  %262 = vmatpush1.msra.mxu0 %v232
  %263 = vmatprep.subr.mxu0 0.0
  %264 = vmatpush1.msra.mxu0 %v233
  %265 = vmatprep.subr.mxu0 0.0
  %266 = vmatpush1.msra.mxu0 %v234
  %267 = vmatprep.subr.mxu0 0.0
  %268 = vmatpush1.msra.mxu0 %v235
  %269 = vmatprep.subr.mxu0 0.0
  %270 = vmatpush1.msra.mxu0 %v236
  %271 = vmatprep.subr.mxu0 0.0
  %272 = vmatpush1.msra.mxu0 %v237
  %273 = vmatprep.subr.mxu0 0.0
  %274 = vmatpush1.msra.mxu0 %v238
  %275 = vmatprep.subr.mxu0 0.0
  %276 = vmatpush1.msra.mxu0 %v239
  %277 = vmatprep.subr.mxu0 0.0
  %278 = vmatpush1.msra.mxu0 %v240
  %279 = vmatprep.subr.mxu0 0.0
  %280 = vmatpush1.msra.mxu0 %v241
  %281 = vmatprep.subr.mxu0 0.0
  %282 = vmatpush1.msra.mxu0 0.0
  %283 = vmatprep.subr.mxu0 0.0
  %284 = vmatpush1.msra.mxu0 0.0
  %285 = vmatprep.subr.mxu0 0.0
  %286 = vmatpush1.msra.mxu0 0.0
  %287 = vmatprep.subr.mxu0 0.0
  %288 = vmatpush1.msra.mxu0 0.0
  %289 = vmatprep.subr.mxu0 0.0
  %290 = vmatpush1.msra.mxu0 0.0
  %291 = vmatprep.subr.mxu0 0.0
  %292 = vmatpush1.msra.mxu0 0.0
  %293 = vmatprep.subr.mxu0 0.0
  %294 = vmatpush1.msra.mxu0 0.0
  %295 = vmatprep.subr.mxu0 0.0
  %296 = vmatpush1.msra.mxu0 0.0
  %297 = vmatprep.subr.mxu0 0.0
  %298 = vmatpush1.msra.mxu0 0.0
  %299 = vmatprep.subr.mxu0 0.0
  %300 = vmatpush1.msra.mxu0 0.0
  %301 = vmatprep.subr.mxu0 0.0
  %302 = vmatpush1.msra.mxu0 0.0
  %303 = vmatprep.subr.mxu0 0.0
  %304 = vmatpush1.msra.mxu0 0.0
  %305 = vmatprep.subr.mxu0 0.0
  %306 = vmatpush1.msra.mxu0 0.0
  %307 = vmatprep.subr.mxu0 0.0
  %308 = vmatpush1.msra.mxu0 0.0
  %309 = vmatprep.subr.mxu0 0.0
  %310 = vmatpush1.msra.mxu0 0.0
  %311 = vmatprep.subr.mxu0 0.0
  %312 = vmatpush1.msra.mxu0 0.0
  %313 = vmatprep.mubr.f32.mxu0 0.0
  %314 = vmatmul.mubr.f32.gmra.mrb[0].mxu0 %v218
  %v315 = vpop.f32.mrb[0].mxu0
  %v316 = vadd.f32 %v247, %v315
  %v317 = vpop.f32.mrb[0].mxu0
  %318 = vmatprep.mubr.f32.mxu0 0.0
  %319 = vmatmul.mubr.f32.gmra.mrb[0].mxu0 %v223
  %v320 = vpop.f32.mrb[0].mxu0
  %v321 = vadd.f32 %v247, %v320
  %v322 = vpop.f32.mrb[0].mxu0
  %323 = vdwg.mxu0
  %324 = vst [vmem:[%s7] sm:$0xff] %v316
  %325 = vst [vmem:[%s7 + $0x8] sm:$0xff] %v321
  // Predicated region
  $region30: #{kuramoto_forward.5} parent=0 // pred_check
    _
  $region31: #{kuramoto_forward.5} parent=0 // pred_check_branch
    %327 = sbr.rel (0) target = $region33
  $region32: #{kuramoto_forward.5} parent=0 // pred_region
    _
  $region33: #{kuramoto_forward.5} parent=0 // pred_fallthru
    _
  // Predicated region
  $region34: #{kuramoto_forward.5} parent=0 // pred_check
    _
  $region35: #{kuramoto_forward.5} parent=0 // pred_check_branch
    %329 = sbr.rel (0) target = $region37
  $region36: #{kuramoto_forward.5} parent=0 // pred_region
    _
  $region37: #{kuramoto_forward.5} parent=0 // pred_fallthru
    _

// kernel: kuramoto_forward.4
$region0: #{kuramoto_forward.4}
  #allocation0 [shape = 'u32[]', space=smem, size = 0x4, offset = 0x4, fixed_abs, tag = 'smem constant byte address 0x4 - core index']
  #allocation1 [shape = 'u32[144,128]{1,0:T(1,128)}', space=vmem, size = 0x12000, scoped, tag = 'internal scratch']
  %s0 = inlined_call_operand.vmem [shape: f32[32,128], index: 0, kind: input, shape index: {}]
  %s1 = inlined_call_operand.vmem [shape: f32[32,128], index: 1, kind: input, shape index: {}]
  %s2 = inlined_call_operand.vmem [shape: f32[32,128], index: 2, kind: input, shape index: {}]
  %s3 = inlined_call_operand.vmem [shape: f32[128,128], index: 3, kind: input, shape index: {}]
  %s4 = inlined_call_operand.vmem [shape: f32[1,128], index: 4, kind: input, shape index: {}]
  %s5 = inlined_call_operand.vmem [shape: f32[128,128], index: 5, kind: input, shape index: {}]
  %s6 = inlined_call_operand.vmem [shape: f32[1,128], index: 6, kind: input, shape index: {}]
  %s7 = inlined_call_operand.vmem [shape: f32[128,128], index: 7, kind: input, shape index: {}]
  %s8 = inlined_call_operand.vmem [shape: f32[1,128], index: 8, kind: input, shape index: {}]
  %s9 = inlined_call_operand.vmem [shape: f32[32,128], index: 9, kind: output, shape index: {}]
  %s10 = sld [smem:[#allocation0]]
  $region46: #{kuramoto_forward.4} parent=0
    _
  %s12 = ssub.s32 1, %s10
  %s13 = scalar_select 0, %s12, %s10
  // Predicated region
  $region2: #{kuramoto_forward.4} parent=0 // pred_check
    _
  $region3: #{kuramoto_forward.4} parent=0 // pred_check_branch
    %15 = sbr.rel (0) target = $region5
  $region4: #{kuramoto_forward.4} parent=0 // pred_region
    _
  $region5: #{kuramoto_forward.4} parent=0 // pred_fallthru
    _
  // Predicated region
  $region6: #{kuramoto_forward.4} parent=0 // pred_check
    _
  $region7: #{kuramoto_forward.4} parent=0 // pred_check_branch
    %17 = sbr.rel (0) target = $region9
  $region8: #{kuramoto_forward.4} parent=0 // pred_region
    _
  $region9: #{kuramoto_forward.4} parent=0 // pred_fallthru
    _
  // Predicated region
  $region10: #{kuramoto_forward.4} parent=0 // pred_check
    _
  $region11: #{kuramoto_forward.4} parent=0 // pred_check_branch
    %19 = sbr.rel (0) target = $region13
  $region12: #{kuramoto_forward.4} parent=0 // pred_region
    _
  $region13: #{kuramoto_forward.4} parent=0 // pred_fallthru
    _
  // Predicated region
  $region14: #{kuramoto_forward.4} parent=0 // pred_check
    _
  $region15: #{kuramoto_forward.4} parent=0 // pred_check_branch
    %21 = sbr.rel (0) target = $region17
  $region16: #{kuramoto_forward.4} parent=0 // pred_region
    _
  $region17: #{kuramoto_forward.4} parent=0 // pred_fallthru
    _
  // Predicated region
  $region18: #{kuramoto_forward.4} parent=0 // pred_check
    _
  $region19: #{kuramoto_forward.4} parent=0 // pred_check_branch
    %23 = sbr.rel (0) target = $region21
  $region20: #{kuramoto_forward.4} parent=0 // pred_region
    _
  $region21: #{kuramoto_forward.4} parent=0 // pred_fallthru
    _
  // Predicated region
  $region22: #{kuramoto_forward.4} parent=0 // pred_check
    _
  $region23: #{kuramoto_forward.4} parent=0 // pred_check_branch
    %25 = sbr.rel (0) target = $region25
  $region24: #{kuramoto_forward.4} parent=0 // pred_region
    _
  $region25: #{kuramoto_forward.4} parent=0 // pred_fallthru
    _
  // Predicated region
  $region26: #{kuramoto_forward.4} parent=0 // pred_check
    _
  $region27: #{kuramoto_forward.4} parent=0 // pred_check_branch
    %27 = sbr.rel (0) target = $region29
  $region28: #{kuramoto_forward.4} parent=0 // pred_region
    _
  $region29: #{kuramoto_forward.4} parent=0 // pred_fallthru
    _
  // Predicated region
  $region30: #{kuramoto_forward.4} parent=0 // pred_check
    _
  $region31: #{kuramoto_forward.4} parent=0 // pred_check_branch
    %29 = sbr.rel (0) target = $region33
  $region32: #{kuramoto_forward.4} parent=0 // pred_region
    _
  $region33: #{kuramoto_forward.4} parent=0 // pred_fallthru
    _
  // Predicated region
  $region34: #{kuramoto_forward.4} parent=0 // pred_check
    _
  $region35: #{kuramoto_forward.4} parent=0 // pred_check_branch
    %31 = sbr.rel (0) target = $region37
  $region36: #{kuramoto_forward.4} parent=0 // pred_region
    _
  $region37: #{kuramoto_forward.4} parent=0 // pred_fallthru
    _
  %v32 = vld [vmem:[%s0] sm:$0xff]
  %v33 = vld [vmem:[%s0 + $0x8] sm:$0xff]
  %v34 = vld [vmem:[%s0 + $0x10] sm:$0xff]
  %v35 = vld [vmem:[%s0 + $0x18] sm:$0xff]
  %v36 = vld [vmem:[%s3] sm:$0xff]
  %v37 = vld [vmem:[%s3 + $0x8] sm:$0xff]
  %v38 = vld [vmem:[%s3 + $0x10] sm:$0xff]
  %v39 = vld [vmem:[%s3 + $0x18] sm:$0xff]
  %v40 = vld [vmem:[%s3 + $0x20] sm:$0xff]
  %v41 = vld [vmem:[%s3 + $0x28] sm:$0xff]
  %v42 = vld [vmem:[%s3 + $0x30] sm:$0xff]
  %v43 = vld [vmem:[%s3 + $0x38] sm:$0xff]
  %v44 = vld [vmem:[%s3 + $0x40] sm:$0xff]
  %v45 = vld [vmem:[%s3 + $0x48] sm:$0xff]
  %v46 = vld [vmem:[%s3 + $0x50] sm:$0xff]
  %v47 = vld [vmem:[%s3 + $0x58] sm:$0xff]
  %v48 = vld [vmem:[%s3 + $0x60] sm:$0xff]
  %v49 = vld [vmem:[%s3 + $0x68] sm:$0xff]
  %v50 = vld [vmem:[%s3 + $0x70] sm:$0xff]
  %v51 = vld [vmem:[%s3 + $0x78] sm:$0xff]
  %v52 = vld [vmem:[%s4] sm:$0x1]
  %v54 = vlaneseq
  %v55 = vshrl.u32 %v54, 7
  %v56 = vsub.s32 0, %v55
  %v57 = vrot.slane %v52, %v56
  %59 = vmatprep.subr.mxu0 0.0
  %60 = vmatpush1.msra.mxu0 %v36
  %61 = vmatprep.subr.mxu0 0.0
  %62 = vmatpush1.msra.mxu0 %v37
  %63 = vmatprep.subr.mxu0 0.0
  %64 = vmatpush1.msra.mxu0 %v38
  %65 = vmatprep.subr.mxu0 0.0
  %66 = vmatpush1.msra.mxu0 %v39
  %67 = vmatprep.subr.mxu0 0.0
  %68 = vmatpush1.msra.mxu0 %v40
  %69 = vmatprep.subr.mxu0 0.0
  %70 = vmatpush1.msra.mxu0 %v41
  %71 = vmatprep.subr.mxu0 0.0
  %72 = vmatpush1.msra.mxu0 %v42
  %73 = vmatprep.subr.mxu0 0.0
  %74 = vmatpush1.msra.mxu0 %v43
  %75 = vmatprep.subr.mxu0 0.0
  %76 = vmatpush1.msra.mxu0 %v44
  %77 = vmatprep.subr.mxu0 0.0
  %78 = vmatpush1.msra.mxu0 %v45
  %79 = vmatprep.subr.mxu0 0.0
  %80 = vmatpush1.msra.mxu0 %v46
  %81 = vmatprep.subr.mxu0 0.0
  %82 = vmatpush1.msra.mxu0 %v47
  %83 = vmatprep.subr.mxu0 0.0
  %84 = vmatpush1.msra.mxu0 %v48
  %85 = vmatprep.subr.mxu0 0.0
  %86 = vmatpush1.msra.mxu0 %v49
  %87 = vmatprep.subr.mxu0 0.0
  %88 = vmatpush1.msra.mxu0 %v50
  %89 = vmatprep.subr.mxu0 0.0
  %90 = vmatpush1.msra.mxu0 %v51
  %91 = vmatprep.subr.mxu0 0.0
  %92 = vmatpush1.msra.mxu0 0.0
  %93 = vmatprep.subr.mxu0 0.0
  %94 = vmatpush1.msra.mxu0 0.0
  %95 = vmatprep.subr.mxu0 0.0
  %96 = vmatpush1.msra.mxu0 0.0
  %97 = vmatprep.subr.mxu0 0.0
  %98 = vmatpush1.msra.mxu0 0.0
  %99 = vmatprep.subr.mxu0 0.0
  %100 = vmatpush1.msra.mxu0 0.0
  %101 = vmatprep.subr.mxu0 0.0
  %102 = vmatpush1.msra.mxu0 0.0
  %103 = vmatprep.subr.mxu0 0.0
  %104 = vmatpush1.msra.mxu0 0.0
  %105 = vmatprep.subr.mxu0 0.0
  %106 = vmatpush1.msra.mxu0 0.0
  %107 = vmatprep.subr.mxu0 0.0
  %108 = vmatpush1.msra.mxu0 0.0
  %109 = vmatprep.subr.mxu0 0.0
  %110 = vmatpush1.msra.mxu0 0.0
  %111 = vmatprep.subr.mxu0 0.0
  %112 = vmatpush1.msra.mxu0 0.0
  %113 = vmatprep.subr.mxu0 0.0
  %114 = vmatpush1.msra.mxu0 0.0
  %115 = vmatprep.subr.mxu0 0.0
  %116 = vmatpush1.msra.mxu0 0.0
  %117 = vmatprep.subr.mxu0 0.0
  %118 = vmatpush1.msra.mxu0 0.0
  %119 = vmatprep.subr.mxu0 0.0
  %120 = vmatpush1.msra.mxu0 0.0
  %121 = vmatprep.subr.mxu0 0.0
  %122 = vmatpush1.msra.mxu0 0.0
  %123 = vmatprep.mubr.f32.mxu0 0.0
  %124 = vmatmul.mubr.f32.gmra.mrb[0].mxu0 %v32
  %v125 = vpop.f32.mrb[0].mxu0
  %v126 = vadd.f32 %v57, %v125
  %v127 = vpop.f32.mrb[0].mxu0
  %128 = vmatprep.mubr.f32.mxu0 0.0
  %129 = vmatmul.mubr.f32.gmra.mrb[0].mxu0 %v33
  %v130 = vpop.f32.mrb[0].mxu0
  %v131 = vadd.f32 %v57, %v130
  %v132 = vpop.f32.mrb[0].mxu0
  %133 = vmatprep.mubr.f32.mxu0 0.0
  %134 = vmatmul.mubr.f32.gmra.mrb[0].mxu0 %v34
  %v135 = vpop.f32.mrb[0].mxu0
  %v136 = vadd.f32 %v57, %v135
  %v137 = vpop.f32.mrb[0].mxu0
  %138 = vmatprep.mubr.f32.mxu0 0.0
  %139 = vmatmul.mubr.f32.gmra.mrb[0].mxu0 %v35
  %v140 = vpop.f32.mrb[0].mxu0
  %v141 = vadd.f32 %v57, %v140
  %v142 = vpop.f32.mrb[0].mxu0
  %143 = vdwg.mxu0
  %v144 = vmax.f32 %v126, 0.0
  %v145 = vmax.f32 %v131, 0.0
  %v146 = vmax.f32 %v136, 0.0
  %v147 = vmax.f32 %v141, 0.0
  %v148 = vld [vmem:[%s1] sm:$0xff]
  %v149 = vld [vmem:[%s1 + $0x8] sm:$0xff]
  %v150 = vld [vmem:[%s1 + $0x10] sm:$0xff]
  %v151 = vld [vmem:[%s1 + $0x18] sm:$0xff]
  %v152 = vld [vmem:[%s2] sm:$0xff]
  %v153 = vld [vmem:[%s2 + $0x8] sm:$0xff]
  %v154 = vld [vmem:[%s2 + $0x10] sm:$0xff]
  %v155 = vld [vmem:[%s2 + $0x18] sm:$0xff]
  %v156 = vadd.f32 %v148, %v152
  %v157 = vadd.f32 %v149, %v153
  %v158 = vadd.f32 %v150, %v154
  %v159 = vadd.f32 %v151, %v155
  %v160 = vld [vmem:[%s6] sm:$0x1]
  %v162 = vlaneseq
  %v163 = vshrl.u32 %v162, 7
  %v164 = vsub.s32 0, %v163
  %v165 = vrot.slane %v160, %v164
  %v167 = vadd.f32 %v156, %v165
  %v168 = vadd.f32 %v157, %v165
  %v169 = vadd.f32 %v158, %v165
  %v170 = vadd.f32 %v159, %v165
  %v171 = vld [vmem:[%s5] sm:$0xff]
  %v172 = vld [vmem:[%s5 + $0x8] sm:$0xff]
  %v173 = vld [vmem:[%s5 + $0x10] sm:$0xff]
  %v174 = vld [vmem:[%s5 + $0x18] sm:$0xff]
  %v175 = vld [vmem:[%s5 + $0x20] sm:$0xff]
  %v176 = vld [vmem:[%s5 + $0x28] sm:$0xff]
  %v177 = vld [vmem:[%s5 + $0x30] sm:$0xff]
  %v178 = vld [vmem:[%s5 + $0x38] sm:$0xff]
  %v179 = vld [vmem:[%s5 + $0x40] sm:$0xff]
  %v180 = vld [vmem:[%s5 + $0x48] sm:$0xff]
  %v181 = vld [vmem:[%s5 + $0x50] sm:$0xff]
  %v182 = vld [vmem:[%s5 + $0x58] sm:$0xff]
  %v183 = vld [vmem:[%s5 + $0x60] sm:$0xff]
  %v184 = vld [vmem:[%s5 + $0x68] sm:$0xff]
  %v185 = vld [vmem:[%s5 + $0x70] sm:$0xff]
  %v186 = vld [vmem:[%s5 + $0x78] sm:$0xff]
  %187 = vmatprep.subr.mxu0 0.0
  %188 = vmatpush1.msra.mxu0 %v171
  %189 = vmatprep.subr.mxu0 0.0
  %190 = vmatpush1.msra.mxu0 %v172
  %191 = vmatprep.subr.mxu0 0.0
  %192 = vmatpush1.msra.mxu0 %v173
  %193 = vmatprep.subr.mxu0 0.0
  %194 = vmatpush1.msra.mxu0 %v174
  %195 = vmatprep.subr.mxu0 0.0
  %196 = vmatpush1.msra.mxu0 %v175
  %197 = vmatprep.subr.mxu0 0.0
  %198 = vmatpush1.msra.mxu0 %v176
  %199 = vmatprep.subr.mxu0 0.0
  %200 = vmatpush1.msra.mxu0 %v177
  %201 = vmatprep.subr.mxu0 0.0
  %202 = vmatpush1.msra.mxu0 %v178
  %203 = vmatprep.subr.mxu0 0.0
  %204 = vmatpush1.msra.mxu0 %v179
  %205 = vmatprep.subr.mxu0 0.0
  %206 = vmatpush1.msra.mxu0 %v180
  %207 = vmatprep.subr.mxu0 0.0
  %208 = vmatpush1.msra.mxu0 %v181
  %209 = vmatprep.subr.mxu0 0.0
  %210 = vmatpush1.msra.mxu0 %v182
  %211 = vmatprep.subr.mxu0 0.0
  %212 = vmatpush1.msra.mxu0 %v183
  %213 = vmatprep.subr.mxu0 0.0
  %214 = vmatpush1.msra.mxu0 %v184
  %215 = vmatprep.subr.mxu0 0.0
  %216 = vmatpush1.msra.mxu0 %v185
  %217 = vmatprep.subr.mxu0 0.0
  %218 = vmatpush1.msra.mxu0 %v186
  %219 = vmatprep.subr.mxu0 0.0
  %220 = vmatpush1.msra.mxu0 0.0
  %221 = vmatprep.subr.mxu0 0.0
  %222 = vmatpush1.msra.mxu0 0.0
  %223 = vmatprep.subr.mxu0 0.0
  %224 = vmatpush1.msra.mxu0 0.0
  %225 = vmatprep.subr.mxu0 0.0
  %226 = vmatpush1.msra.mxu0 0.0
  %227 = vmatprep.subr.mxu0 0.0
  %228 = vmatpush1.msra.mxu0 0.0
  %229 = vmatprep.subr.mxu0 0.0
  %230 = vmatpush1.msra.mxu0 0.0
  %231 = vmatprep.subr.mxu0 0.0
  %232 = vmatpush1.msra.mxu0 0.0
  %233 = vmatprep.subr.mxu0 0.0
  %234 = vmatpush1.msra.mxu0 0.0
  %235 = vmatprep.subr.mxu0 0.0
  %236 = vmatpush1.msra.mxu0 0.0
  %237 = vmatprep.subr.mxu0 0.0
  %238 = vmatpush1.msra.mxu0 0.0
  %239 = vmatprep.subr.mxu0 0.0
  %240 = vmatpush1.msra.mxu0 0.0
  %241 = vmatprep.subr.mxu0 0.0
  %242 = vmatpush1.msra.mxu0 0.0
  %243 = vmatprep.subr.mxu0 0.0
  %244 = vmatpush1.msra.mxu0 0.0
  %245 = vmatprep.subr.mxu0 0.0
  %246 = vmatpush1.msra.mxu0 0.0
  %247 = vmatprep.subr.mxu0 0.0
  %248 = vmatpush1.msra.mxu0 0.0
  %249 = vmatprep.subr.mxu0 0.0
  %250 = vmatpush1.msra.mxu0 0.0
  %251 = vmatprep.mubr.f32.mxu0 0.0
  %252 = vmatmul.mubr.f32.gmra.mrb[0].mxu0 %v144
  %v253 = vpop.f32.mrb[0].mxu0
  %v254 = vadd.f32 0.0, %v253
  %v255 = vpop.f32.mrb[0].mxu0
  %256 = vmatprep.mubr.f32.mxu0 0.0
  %257 = vmatmul.mubr.f32.gmra.mrb[0].mxu0 %v145
  %v258 = vpop.f32.mrb[0].mxu0
  %v259 = vadd.f32 0.0, %v258
  %v260 = vpop.f32.mrb[0].mxu0
  %261 = vmatprep.mubr.f32.mxu0 0.0
  %262 = vmatmul.mubr.f32.gmra.mrb[0].mxu0 %v146
  %v263 = vpop.f32.mrb[0].mxu0
  %v264 = vadd.f32 0.0, %v263
  %v265 = vpop.f32.mrb[0].mxu0
  %266 = vmatprep.mubr.f32.mxu0 0.0
  %267 = vmatmul.mubr.f32.gmra.mrb[0].mxu0 %v147
  %v268 = vpop.f32.mrb[0].mxu0
  %v269 = vadd.f32 0.0, %v268
  %v270 = vpop.f32.mrb[0].mxu0
  %271 = vdwg.mxu0
  %v272 = vadd.f32 %v167, %v254
  %v273 = vadd.f32 %v168, %v259
  %v274 = vadd.f32 %v169, %v264
  %v275 = vadd.f32 %v170, %v269
  %v276 = vmax.f32 %v272, 0.0
  %v277 = vmax.f32 %v273, 0.0
  %v278 = vmax.f32 %v274, 0.0
  %v279 = vmax.f32 %v275, 0.0
  %v280 = vld [vmem:[%s7] sm:$0xff]
  %v281 = vld [vmem:[%s7 + $0x8] sm:$0xff]
  %v282 = vld [vmem:[%s7 + $0x10] sm:$0xff]
  %v283 = vld [vmem:[%s7 + $0x18] sm:$0xff]
  %v284 = vld [vmem:[%s7 + $0x20] sm:$0xff]
  %v285 = vld [vmem:[%s7 + $0x28] sm:$0xff]
  %v286 = vld [vmem:[%s7 + $0x30] sm:$0xff]
  %v287 = vld [vmem:[%s7 + $0x38] sm:$0xff]
  %v288 = vld [vmem:[%s7 + $0x40] sm:$0xff]
  %v289 = vld [vmem:[%s7 + $0x48] sm:$0xff]
  %v290 = vld [vmem:[%s7 + $0x50] sm:$0xff]
  %v291 = vld [vmem:[%s7 + $0x58] sm:$0xff]
  %v292 = vld [vmem:[%s7 + $0x60] sm:$0xff]
  %v293 = vld [vmem:[%s7 + $0x68] sm:$0xff]
  %v294 = vld [vmem:[%s7 + $0x70] sm:$0xff]
  %v295 = vld [vmem:[%s7 + $0x78] sm:$0xff]
  %v296 = vld [vmem:[%s8] sm:$0x1]
  %v298 = vlaneseq
  %v299 = vshrl.u32 %v298, 7
  %v300 = vsub.s32 0, %v299
  %v301 = vrot.slane %v296, %v300
  %303 = vmatprep.subr.mxu0 0.0
  %304 = vmatpush1.msra.mxu0 %v280
  %305 = vmatprep.subr.mxu0 0.0
  %306 = vmatpush1.msra.mxu0 %v281
  %307 = vmatprep.subr.mxu0 0.0
  %308 = vmatpush1.msra.mxu0 %v282
  %309 = vmatprep.subr.mxu0 0.0
  %310 = vmatpush1.msra.mxu0 %v283
  %311 = vmatprep.subr.mxu0 0.0
  %312 = vmatpush1.msra.mxu0 %v284
  %313 = vmatprep.subr.mxu0 0.0
  %314 = vmatpush1.msra.mxu0 %v285
  %315 = vmatprep.subr.mxu0 0.0
  %316 = vmatpush1.msra.mxu0 %v286
  %317 = vmatprep.subr.mxu0 0.0
  %318 = vmatpush1.msra.mxu0 %v287
  %319 = vmatprep.subr.mxu0 0.0
  %320 = vmatpush1.msra.mxu0 %v288
  %321 = vmatprep.subr.mxu0 0.0
  %322 = vmatpush1.msra.mxu0 %v289
  %323 = vmatprep.subr.mxu0 0.0
  %324 = vmatpush1.msra.mxu0 %v290
  %325 = vmatprep.subr.mxu0 0.0
  %326 = vmatpush1.msra.mxu0 %v291
  %327 = vmatprep.subr.mxu0 0.0
  %328 = vmatpush1.msra.mxu0 %v292
  %329 = vmatprep.subr.mxu0 0.0
  %330 = vmatpush1.msra.mxu0 %v293
  %331 = vmatprep.subr.mxu0 0.0
  %332 = vmatpush1.msra.mxu0 %v294
  %333 = vmatprep.subr.mxu0 0.0
  %334 = vmatpush1.msra.mxu0 %v295
  %335 = vmatprep.subr.mxu0 0.0
  %336 = vmatpush1.msra.mxu0 0.0
  %337 = vmatprep.subr.mxu0 0.0
  %338 = vmatpush1.msra.mxu0 0.0
  %339 = vmatprep.subr.mxu0 0.0
  %340 = vmatpush1.msra.mxu0 0.0
  %341 = vmatprep.subr.mxu0 0.0
  %342 = vmatpush1.msra.mxu0 0.0
  %343 = vmatprep.subr.mxu0 0.0
  %344 = vmatpush1.msra.mxu0 0.0
  %345 = vmatprep.subr.mxu0 0.0
  %346 = vmatpush1.msra.mxu0 0.0
  %347 = vmatprep.subr.mxu0 0.0
  %348 = vmatpush1.msra.mxu0 0.0
  %349 = vmatprep.subr.mxu0 0.0
  %350 = vmatpush1.msra.mxu0 0.0
  %351 = vmatprep.subr.mxu0 0.0
  %352 = vmatpush1.msra.mxu0 0.0
  %353 = vmatprep.subr.mxu0 0.0
  %354 = vmatpush1.msra.mxu0 0.0
  %355 = vmatprep.subr.mxu0 0.0
  %356 = vmatpush1.msra.mxu0 0.0
  %357 = vmatprep.subr.mxu0 0.0
  %358 = vmatpush1.msra.mxu0 0.0
  %359 = vmatprep.subr.mxu0 0.0
  %360 = vmatpush1.msra.mxu0 0.0
  %361 = vmatprep.subr.mxu0 0.0
  %362 = vmatpush1.msra.mxu0 0.0
  %363 = vmatprep.subr.mxu0 0.0
  %364 = vmatpush1.msra.mxu0 0.0
  %365 = vmatprep.subr.mxu0 0.0
  %366 = vmatpush1.msra.mxu0 0.0
  %367 = vmatprep.mubr.f32.mxu0 0.0
  %368 = vmatmul.mubr.f32.gmra.mrb[0].mxu0 %v276
  %v369 = vpop.f32.mrb[0].mxu0
  %v370 = vadd.f32 %v301, %v369
  %v371 = vpop.f32.mrb[0].mxu0
  %372 = vmatprep.mubr.f32.mxu0 0.0
  %373 = vmatmul.mubr.f32.gmra.mrb[0].mxu0 %v277
  %v374 = vpop.f32.mrb[0].mxu0
  %v375 = vadd.f32 %v301, %v374
  %v376 = vpop.f32.mrb[0].mxu0
  %377 = vmatprep.mubr.f32.mxu0 0.0
  %378 = vmatmul.mubr.f32.gmra.mrb[0].mxu0 %v278
  %v379 = vpop.f32.mrb[0].mxu0
  %v380 = vadd.f32 %v301, %v379
  %v381 = vpop.f32.mrb[0].mxu0
  %382 = vmatprep.mubr.f32.mxu0 0.0
  %383 = vmatmul.mubr.f32.gmra.mrb[0].mxu0 %v279
  %v384 = vpop.f32.mrb[0].mxu0
  %v385 = vadd.f32 %v301, %v384
  %v386 = vpop.f32.mrb[0].mxu0
  %387 = vdwg.mxu0
  %388 = vst [vmem:[%s9] sm:$0xff] %v370
  %389 = vst [vmem:[%s9 + $0x8] sm:$0xff] %v375
  %390 = vst [vmem:[%s9 + $0x10] sm:$0xff] %v380
  %391 = vst [vmem:[%s9 + $0x18] sm:$0xff] %v385
  // Predicated region
  $region38: #{kuramoto_forward.4} parent=0 // pred_check
    _
  $region39: #{kuramoto_forward.4} parent=0 // pred_check_branch
    %393 = sbr.rel (0) target = $region41
  $region40: #{kuramoto_forward.4} parent=0 // pred_region
    _
  $region41: #{kuramoto_forward.4} parent=0 // pred_fallthru
    _
  // Predicated region
  $region42: #{kuramoto_forward.4} parent=0 // pred_check
    _
  $region43: #{kuramoto_forward.4} parent=0 // pred_check_branch
    %395 = sbr.rel (0) target = $region45
  $region44: #{kuramoto_forward.4} parent=0 // pred_region
    _
  $region45: #{kuramoto_forward.4} parent=0 // pred_fallthru
    _

</llo_original>
